<compile_context>
chip_gen: v6e
topology: v6e:2x2x1
jax: 0.10.0
libtpu: 0.0.40
codegen_flags: <defaults>
</compile_context>

<pallas_src>
import functools

import jax
import jax.numpy as jnp
import numpy as np
from jax.experimental import pallas as pl
from jax.experimental.pallas import tpu as pltpu

BN_EPS = 1e-5          # PyTorch BatchNorm1d default eps
LANE = 128             # lane width (output feature padding)
BF16_SUBLANE = 16      # sublane packing multiple for bf16 contraction dims


def _round_up(x, m):
    return ((x + m - 1) // m) * m


def _polygcn_kernel(x_ref, poly_ref, *rest, n_layers, adj_pow, fout_pads,
                    apply_bn, n_nodes):
    """Fused PolyGCN forward: all layers + ReLU + BatchNorm in one invocation.

    rest = (wcat_ref_0, ..., wcat_ref_{L-1}, o_ref)

    Per layer l:
      XW = H @ Wcat[l]                (one wide MXU matmul, f32 accumulation)
      Y  = sum_k poly[k] @ XW[:, k*Fp:(k+1)*Fp]     (f32 register accumulator)
      hidden layers: ReLU, then BatchNorm1d(affine=False) with batch stats.
    """
    w_refs = rest[:n_layers]
    o_ref = rest[n_layers]
    inv_n = 1.0 / float(n_nodes)

    # Matmul operands in bf16; all accumulation / elementwise math in f32.
    h = x_ref[...].astype(jnp.bfloat16)            # (N, F_in0_pad)
    y = None
    for li in range(n_layers):
        fop = fout_pads[li]

        # Stage 1: all K per-power projections fused into one wide matmul.
        xw = jnp.dot(h, w_refs[li][...],
                     preferred_element_type=jnp.float32)   # (N, K*fop) f32
        xw = xw.astype(jnp.bfloat16)

        # Stage 2: adjacency-polynomial contraction, accumulated in registers.
        # poly slices are read + cast at the dot call sites (not hoisted across
        # the unrolled layer loop, to keep vreg pressure down).
        y = jnp.dot(poly_ref[0].astype(jnp.bfloat16), xw[:, :fop],
                    preferred_element_type=jnp.float32)
        for k in range(1, adj_pow):                 # static unroll, K is tiny
            y = y + jnp.dot(
                poly_ref[k].astype(jnp.bfloat16),
                xw[:, k * fop:(k + 1) * fop],
                preferred_element_type=jnp.float32)

        if li != n_layers - 1:
            y = jnp.maximum(y, 0.0)                 # ReLU (reference: ReLU, BN)
            if apply_bn:
                # BatchNorm1d(affine=False, track_running_stats=False):
                # batch statistics over the node axis, biased variance, f32.
                s1 = jnp.sum(y, axis=0, keepdims=True)
                s2 = jnp.sum(y * y, axis=0, keepdims=True)
                mean = s1 * inv_n
                var = jnp.maximum(s2 * inv_n - mean * mean, 0.0)
                y = (y - mean) * jax.lax.rsqrt(var + BN_EPS)
            h = y.astype(jnp.bfloat16)

    o_ref[...] = y.astype(o_ref.dtype)


def polygcn_forward(x, poly, w_cats, *, fin0_pad, fout_pads, out_dim,
                    batch_norm):
    """x: (N, F0) f32, poly: (K, N, N), w_cats: list of (F_in_pad, K*F_out_pad) bf16."""
    n_nodes, f0 = x.shape
    adj_pow = poly.shape[0]
    n_layers = len(w_cats)

    x = x.astype(jnp.float32)
    if f0 != fin0_pad:   # pad contraction dim to the bf16 sublane multiple only
        x = jnp.zeros((n_nodes, fin0_pad), jnp.float32).at[:, :f0].set(x)
    poly = poly.astype(jnp.float32)   # no relayout; cast to bf16 in-kernel

    kernel = functools.partial(
        _polygcn_kernel,
        n_layers=n_layers,
        adj_pow=adj_pow,
        fout_pads=fout_pads,
        apply_bn=batch_norm,
        n_nodes=n_nodes,
    )

    # Scoped-VMEM budget sized from the actual resident operands (+ headroom).
    operand_bytes = (x.size * 4 + poly.size * 4
                     + sum(int(w.size) * 2 for w in w_cats)
                     + n_nodes * fout_pads[-1] * 4)
    vmem_limit_bytes = int(max(16 * 2**20, 2 * operand_bytes + 2 * 2**20))

    out = pl.pallas_call(
        kernel,
        out_shape=jax.ShapeDtypeStruct((n_nodes, fout_pads[-1]), jnp.float32),
        in_specs=[pl.BlockSpec(memory_space=pltpu.MemorySpace.VMEM)]
        * (2 + n_layers),
        out_specs=pl.BlockSpec(memory_space=pltpu.MemorySpace.VMEM),
        compiler_params=pltpu.CompilerParams(vmem_limit_bytes=vmem_limit_bytes),
    )(x, poly, *w_cats)

    return out[:, :out_dim]


class PolyGCNPallas:
    """JAX/Pallas port of PolyGCN (inference / eval-mode forward)."""

    def __init__(self, *, input_dim, hidden_dims, output_dim, adj_pow,
                 p_dropout, rand_seed, batch_norm):
        self.p = p_dropout
        self.batch_norm = batch_norm
        self.adj_pow = adj_pow

        layer_dims = list(
            np.concatenate([hidden_dims, [output_dim]]).astype(np.int32))
        dims = [int(input_dim)] + [int(d) for d in layer_dims]
        self.dims = dims
        self.out_dim = dims[-1]
        n_layers = len(dims) - 1

        # Deterministic init mirroring kaiming_normal_(mode='fan_in', relu) on a
        # (adj_pow, in, out) tensor: PyTorch's fan_in = in_features * out_features.
        key = jax.random.PRNGKey(rand_seed)
        self.weights = []
        for i in range(n_layers):
            key, sub = jax.random.split(key)
            fan_in = dims[i] * dims[i + 1]
            std = float(np.sqrt(2.0) / np.sqrt(fan_in))
            w = std * jax.random.normal(
                sub, (adj_pow, dims[i], dims[i + 1]), dtype=jnp.float32)
            self.weights.append(w)

        # Padded feature dims: only output (lane) dims padded to 128; layer-0
        # contraction dim padded only to the bf16 sublane multiple (16).
        self.fout_pads = tuple(
            _round_up(dims[l + 1], LANE) for l in range(n_layers))
        self.fin_pads = (_round_up(dims[0], BF16_SUBLANE),) + self.fout_pads[:-1]

        # Pre-pack per-layer weights into (F_in_pad, K * F_out_pad) bf16, ONCE.
        self.w_cats = []
        for l, w in enumerate(self.weights):
            fi, fo = dims[l], dims[l + 1]
            fip, fop = self.fin_pads[l], self.fout_pads[l]
            wc = jnp.zeros((fip, adj_pow * fop), jnp.float32)
            for k in range(adj_pow):
                wc = wc.at[:fi, k * fop:k * fop + fo].set(w[k])
            self.w_cats.append(wc.astype(jnp.bfloat16))

    def __call__(self, x, poly):
        # TODO(synk): dropout is identity here (eval mode / p_dropout=0), so it
        # is not materialized in-kernel.
        return polygcn_forward(
            x, poly, self.w_cats,
            fin0_pad=self.fin_pads[0],
            fout_pads=self.fout_pads,
            out_dim=self.out_dim,
            batch_norm=self.batch_norm)


def _reference_forward(x, poly, weights, batch_norm):
    """Pure-JAX f32 reference matching the PyTorch forward (eval mode)."""
    h = x.astype(jnp.float32)
    n_layers = len(weights)
    for li, w in enumerate(weights):
        out = jnp.zeros((h.shape[0], w.shape[2]), jnp.float32)
        for k in range(poly.shape[0]):
            out = out + poly[k] @ (h @ w[k])
        if li != n_layers - 1:
            out = jnp.maximum(out, 0.0)
            if batch_norm:
                mean = jnp.mean(out, axis=0, keepdims=True)
                var = jnp.mean((out - mean) ** 2, axis=0, keepdims=True)
                out = (out - mean) * jax.lax.rsqrt(var + BN_EPS)
        h = out
    return h


if __name__ == "__main__":
    # Small config consistent with the module's forward.
    N = 64            # number of graph nodes
    input_dim = 16
    hidden_dims = [32, 32]
    output_dim = 8
    adj_pow = 3

    model = PolyGCNPallas(
        input_dim=input_dim,
        hidden_dims=hidden_dims,
        output_dim=output_dim,
        adj_pow=adj_pow,
        p_dropout=0.0,
        rand_seed=0,
        batch_norm=True,
    )

    key = jax.random.PRNGKey(0)
    kx, ka = jax.random.split(key)
    x = jax.random.normal(kx, (N, input_dim), dtype=jnp.float32)

    # Symmetric normalized adjacency and its polynomial list [I, A, A^2].
    a = jax.random.uniform(ka, (N, N), dtype=jnp.float32)
    a = (a + a.T) * 0.5
    deg = jnp.sum(a, axis=1)
    d_inv_sqrt = 1.0 / jnp.sqrt(deg)
    a_norm = a * d_inv_sqrt[:, None] * d_inv_sqrt[None, :]
    poly = jnp.stack(
        [jnp.eye(N, dtype=jnp.float32), a_norm, a_norm @ a_norm], axis=0)

    out = model(x, poly)
    out = jax.block_until_ready(out)
    assert out.shape == (N, output_dim)

    ref = jax.block_until_ready(
        _reference_forward(x, poly, model.weights, batch_norm=True))
    assert jnp.allclose(out, ref, atol=3e-2, rtol=3e-2), (
        float(jnp.max(jnp.abs(out - ref))))

    print("KERNEL_OK")
</pallas_src>

<mosaic_0001>
module attributes {stable_mosaic.version = 11 : i64} {
  func.func @_polygcn_kernel(%arg0: memref<64x16xf32, #tpu.memory_space<vmem>>, %arg1: memref<3x64x64xf32, #tpu.memory_space<vmem>>, %arg2: memref<16x384xbf16, #tpu.memory_space<vmem>>, %arg3: memref<128x384xbf16, #tpu.memory_space<vmem>>, %arg4: memref<128x384xbf16, #tpu.memory_space<vmem>>, %arg5: memref<64x128xf32, #tpu.memory_space<vmem>>) attributes {dimension_semantics = [], scalar_prefetch = 0 : i64, scratch_operands = 0 : i64, tpu.core_type = #tpu.core_type<tc>} {
    %c0 = arith.constant 0 : index
    %c0_0 = arith.constant 0 : index
    %0 = vector.load %arg0[%c0, %c0_0] : memref<64x16xf32, #tpu.memory_space<vmem>>, vector<64x16xf32>
    %1 = arith.truncf %0 : vector<64x16xf32> to vector<64x16xbf16>
    %c0_1 = arith.constant 0 : index
    %c0_2 = arith.constant 0 : index
    %2 = vector.load %arg2[%c0_1, %c0_2] : memref<16x384xbf16, #tpu.memory_space<vmem>>, vector<16x384xbf16>
    %cst = arith.constant dense<0.000000e+00> : vector<64x384xf32>
    %3 = tpu.matmul %1, %2, %cst {dimension_numbers = #tpu.dot_dimension_numbers<[1], [0], [0], [1], [0, 0, 1, 1], [], []>} : vector<64x16xbf16>, vector<16x384xbf16>, vector<64x384xf32> -> vector<64x384xf32>
    %4 = arith.truncf %3 : vector<64x384xf32> to vector<64x384xbf16>
    %c0_3 = arith.constant 0 : index
    %c0_4 = arith.constant 0 : index
    %c0_5 = arith.constant 0 : index
    %5 = vector.load %arg1[%c0_3, %c0_4, %c0_5] : memref<3x64x64xf32, #tpu.memory_space<vmem>>, vector<1x64x64xf32>
    %6 = vector.shape_cast %5 : vector<1x64x64xf32> to vector<64x64xf32>
    %7 = arith.truncf %6 : vector<64x64xf32> to vector<64x64xbf16>
    %8 = vector.extract_strided_slice %4 {offsets = [0, 0], sizes = [64, 128], strides = [1, 1]} : vector<64x384xbf16> to vector<64x128xbf16>
    %cst_6 = arith.constant dense<0.000000e+00> : vector<64x128xf32>
    %9 = tpu.matmul %7, %8, %cst_6 {dimension_numbers = #tpu.dot_dimension_numbers<[1], [0], [0], [1], [0, 0, 1, 1], [], []>} : vector<64x64xbf16>, vector<64x128xbf16>, vector<64x128xf32> -> vector<64x128xf32>
    %c1 = arith.constant 1 : index
    %c0_7 = arith.constant 0 : index
    %c0_8 = arith.constant 0 : index
    %10 = vector.load %arg1[%c1, %c0_7, %c0_8] : memref<3x64x64xf32, #tpu.memory_space<vmem>>, vector<1x64x64xf32>
    %11 = vector.shape_cast %10 : vector<1x64x64xf32> to vector<64x64xf32>
    %12 = arith.truncf %11 : vector<64x64xf32> to vector<64x64xbf16>
    %13 = vector.extract_strided_slice %4 {offsets = [0, 128], sizes = [64, 128], strides = [1, 1]} : vector<64x384xbf16> to vector<64x128xbf16>
    %cst_9 = arith.constant dense<0.000000e+00> : vector<64x128xf32>
    %14 = tpu.matmul %12, %13, %cst_9 {dimension_numbers = #tpu.dot_dimension_numbers<[1], [0], [0], [1], [0, 0, 1, 1], [], []>} : vector<64x64xbf16>, vector<64x128xbf16>, vector<64x128xf32> -> vector<64x128xf32>
    %15 = arith.addf %9, %14 : vector<64x128xf32>
    %c2 = arith.constant 2 : index
    %c0_10 = arith.constant 0 : index
    %c0_11 = arith.constant 0 : index
    %16 = vector.load %arg1[%c2, %c0_10, %c0_11] : memref<3x64x64xf32, #tpu.memory_space<vmem>>, vector<1x64x64xf32>
    %17 = vector.shape_cast %16 : vector<1x64x64xf32> to vector<64x64xf32>
    %18 = arith.truncf %17 : vector<64x64xf32> to vector<64x64xbf16>
    %19 = vector.extract_strided_slice %4 {offsets = [0, 256], sizes = [64, 128], strides = [1, 1]} : vector<64x384xbf16> to vector<64x128xbf16>
    %cst_12 = arith.constant dense<0.000000e+00> : vector<64x128xf32>
    %20 = tpu.matmul %18, %19, %cst_12 {dimension_numbers = #tpu.dot_dimension_numbers<[1], [0], [0], [1], [0, 0, 1, 1], [], []>} : vector<64x64xbf16>, vector<64x128xbf16>, vector<64x128xf32> -> vector<64x128xf32>
    %21 = arith.addf %15, %20 : vector<64x128xf32>
    %cst_13 = arith.constant 0.000000e+00 : f32
    %22 = vector.broadcast %cst_13 : f32 to vector<64x128xf32>
    %23 = arith.maximumf %21, %22 : vector<64x128xf32>
    %cst_14 = arith.constant dense<0.000000e+00> : vector<128xf32>
    %24 = vector.multi_reduction <add>, %23, %cst_14 [0] : vector<64x128xf32> to vector<128xf32>
    %25 = vector.shape_cast %24 : vector<128xf32> to vector<1x128xf32>
    %26 = arith.mulf %23, %23 : vector<64x128xf32>
    %cst_15 = arith.constant dense<0.000000e+00> : vector<128xf32>
    %27 = vector.multi_reduction <add>, %26, %cst_15 [0] : vector<64x128xf32> to vector<128xf32>
    %28 = vector.shape_cast %27 : vector<128xf32> to vector<1x128xf32>
    %cst_16 = arith.constant 1.562500e-02 : f32
    %29 = vector.broadcast %cst_16 : f32 to vector<1x128xf32>
    %30 = arith.mulf %25, %29 : vector<1x128xf32>
    %cst_17 = arith.constant 1.562500e-02 : f32
    %31 = vector.broadcast %cst_17 : f32 to vector<1x128xf32>
    %32 = arith.mulf %28, %31 : vector<1x128xf32>
    %33 = arith.mulf %30, %30 : vector<1x128xf32>
    %34 = arith.subf %32, %33 : vector<1x128xf32>
    %cst_18 = arith.constant 0.000000e+00 : f32
    %35 = vector.broadcast %cst_18 : f32 to vector<1x128xf32>
    %36 = arith.maximumf %34, %35 : vector<1x128xf32>
    %37 = vector.broadcast %30 : vector<1x128xf32> to vector<64x128xf32>
    %38 = arith.subf %23, %37 : vector<64x128xf32>
    %cst_19 = arith.constant 9.99999974E-6 : f32
    %39 = vector.broadcast %cst_19 : f32 to vector<1x128xf32>
    %40 = arith.addf %36, %39 : vector<1x128xf32>
    %41 = math.rsqrt %40 : vector<1x128xf32>
    %42 = vector.broadcast %41 : vector<1x128xf32> to vector<64x128xf32>
    %43 = arith.mulf %38, %42 : vector<64x128xf32>
    %44 = arith.truncf %43 : vector<64x128xf32> to vector<64x128xbf16>
    %c0_20 = arith.constant 0 : index
    %c0_21 = arith.constant 0 : index
    %45 = vector.load %arg3[%c0_20, %c0_21] : memref<128x384xbf16, #tpu.memory_space<vmem>>, vector<128x384xbf16>
    %cst_22 = arith.constant dense<0.000000e+00> : vector<64x384xf32>
    %46 = tpu.matmul %44, %45, %cst_22 {dimension_numbers = #tpu.dot_dimension_numbers<[1], [0], [0], [1], [0, 0, 1, 1], [], []>} : vector<64x128xbf16>, vector<128x384xbf16>, vector<64x384xf32> -> vector<64x384xf32>
    %47 = arith.truncf %46 : vector<64x384xf32> to vector<64x384xbf16>
    %c0_23 = arith.constant 0 : index
    %c0_24 = arith.constant 0 : index
    %c0_25 = arith.constant 0 : index
    %48 = vector.load %arg1[%c0_23, %c0_24, %c0_25] : memref<3x64x64xf32, #tpu.memory_space<vmem>>, vector<1x64x64xf32>
    %49 = vector.shape_cast %48 : vector<1x64x64xf32> to vector<64x64xf32>
    %50 = arith.truncf %49 : vector<64x64xf32> to vector<64x64xbf16>
    %51 = vector.extract_strided_slice %47 {offsets = [0, 0], sizes = [64, 128], strides = [1, 1]} : vector<64x384xbf16> to vector<64x128xbf16>
    %cst_26 = arith.constant dense<0.000000e+00> : vector<64x128xf32>
    %52 = tpu.matmul %50, %51, %cst_26 {dimension_numbers = #tpu.dot_dimension_numbers<[1], [0], [0], [1], [0, 0, 1, 1], [], []>} : vector<64x64xbf16>, vector<64x128xbf16>, vector<64x128xf32> -> vector<64x128xf32>
    %c1_27 = arith.constant 1 : index
    %c0_28 = arith.constant 0 : index
    %c0_29 = arith.constant 0 : index
    %53 = vector.load %arg1[%c1_27, %c0_28, %c0_29] : memref<3x64x64xf32, #tpu.memory_space<vmem>>, vector<1x64x64xf32>
    %54 = vector.shape_cast %53 : vector<1x64x64xf32> to vector<64x64xf32>
    %55 = arith.truncf %54 : vector<64x64xf32> to vector<64x64xbf16>
    %56 = vector.extract_strided_slice %47 {offsets = [0, 128], sizes = [64, 128], strides = [1, 1]} : vector<64x384xbf16> to vector<64x128xbf16>
    %cst_30 = arith.constant dense<0.000000e+00> : vector<64x128xf32>
    %57 = tpu.matmul %55, %56, %cst_30 {dimension_numbers = #tpu.dot_dimension_numbers<[1], [0], [0], [1], [0, 0, 1, 1], [], []>} : vector<64x64xbf16>, vector<64x128xbf16>, vector<64x128xf32> -> vector<64x128xf32>
    %58 = arith.addf %52, %57 : vector<64x128xf32>
    %c2_31 = arith.constant 2 : index
    %c0_32 = arith.constant 0 : index
    %c0_33 = arith.constant 0 : index
    %59 = vector.load %arg1[%c2_31, %c0_32, %c0_33] : memref<3x64x64xf32, #tpu.memory_space<vmem>>, vector<1x64x64xf32>
    %60 = vector.shape_cast %59 : vector<1x64x64xf32> to vector<64x64xf32>
    %61 = arith.truncf %60 : vector<64x64xf32> to vector<64x64xbf16>
    %62 = vector.extract_strided_slice %47 {offsets = [0, 256], sizes = [64, 128], strides = [1, 1]} : vector<64x384xbf16> to vector<64x128xbf16>
    %cst_34 = arith.constant dense<0.000000e+00> : vector<64x128xf32>
    %63 = tpu.matmul %61, %62, %cst_34 {dimension_numbers = #tpu.dot_dimension_numbers<[1], [0], [0], [1], [0, 0, 1, 1], [], []>} : vector<64x64xbf16>, vector<64x128xbf16>, vector<64x128xf32> -> vector<64x128xf32>
    %64 = arith.addf %58, %63 : vector<64x128xf32>
    %cst_35 = arith.constant 0.000000e+00 : f32
    %65 = vector.broadcast %cst_35 : f32 to vector<64x128xf32>
    %66 = arith.maximumf %64, %65 : vector<64x128xf32>
    %cst_36 = arith.constant dense<0.000000e+00> : vector<128xf32>
    %67 = vector.multi_reduction <add>, %66, %cst_36 [0] : vector<64x128xf32> to vector<128xf32>
    %68 = vector.shape_cast %67 : vector<128xf32> to vector<1x128xf32>
    %69 = arith.mulf %66, %66 : vector<64x128xf32>
    %cst_37 = arith.constant dense<0.000000e+00> : vector<128xf32>
    %70 = vector.multi_reduction <add>, %69, %cst_37 [0] : vector<64x128xf32> to vector<128xf32>
    %71 = vector.shape_cast %70 : vector<128xf32> to vector<1x128xf32>
    %cst_38 = arith.constant 1.562500e-02 : f32
    %72 = vector.broadcast %cst_38 : f32 to vector<1x128xf32>
    %73 = arith.mulf %68, %72 : vector<1x128xf32>
    %cst_39 = arith.constant 1.562500e-02 : f32
    %74 = vector.broadcast %cst_39 : f32 to vector<1x128xf32>
    %75 = arith.mulf %71, %74 : vector<1x128xf32>
    %76 = arith.mulf %73, %73 : vector<1x128xf32>
    %77 = arith.subf %75, %76 : vector<1x128xf32>
    %cst_40 = arith.constant 0.000000e+00 : f32
    %78 = vector.broadcast %cst_40 : f32 to vector<1x128xf32>
    %79 = arith.maximumf %77, %78 : vector<1x128xf32>
    %80 = vector.broadcast %73 : vector<1x128xf32> to vector<64x128xf32>
    %81 = arith.subf %66, %80 : vector<64x128xf32>
    %cst_41 = arith.constant 9.99999974E-6 : f32
    %82 = vector.broadcast %cst_41 : f32 to vector<1x128xf32>
    %83 = arith.addf %79, %82 : vector<1x128xf32>
    %84 = math.rsqrt %83 : vector<1x128xf32>
    %85 = vector.broadcast %84 : vector<1x128xf32> to vector<64x128xf32>
    %86 = arith.mulf %81, %85 : vector<64x128xf32>
    %87 = arith.truncf %86 : vector<64x128xf32> to vector<64x128xbf16>
    %c0_42 = arith.constant 0 : index
    %c0_43 = arith.constant 0 : index
    %88 = vector.load %arg4[%c0_42, %c0_43] : memref<128x384xbf16, #tpu.memory_space<vmem>>, vector<128x384xbf16>
    %cst_44 = arith.constant dense<0.000000e+00> : vector<64x384xf32>
    %89 = tpu.matmul %87, %88, %cst_44 {dimension_numbers = #tpu.dot_dimension_numbers<[1], [0], [0], [1], [0, 0, 1, 1], [], []>} : vector<64x128xbf16>, vector<128x384xbf16>, vector<64x384xf32> -> vector<64x384xf32>
    %90 = arith.truncf %89 : vector<64x384xf32> to vector<64x384xbf16>
    %c0_45 = arith.constant 0 : index
    %c0_46 = arith.constant 0 : index
    %c0_47 = arith.constant 0 : index
    %91 = vector.load %arg1[%c0_45, %c0_46, %c0_47] : memref<3x64x64xf32, #tpu.memory_space<vmem>>, vector<1x64x64xf32>
    %92 = vector.shape_cast %91 : vector<1x64x64xf32> to vector<64x64xf32>
    %93 = arith.truncf %92 : vector<64x64xf32> to vector<64x64xbf16>
    %94 = vector.extract_strided_slice %90 {offsets = [0, 0], sizes = [64, 128], strides = [1, 1]} : vector<64x384xbf16> to vector<64x128xbf16>
    %cst_48 = arith.constant dense<0.000000e+00> : vector<64x128xf32>
    %95 = tpu.matmul %93, %94, %cst_48 {dimension_numbers = #tpu.dot_dimension_numbers<[1], [0], [0], [1], [0, 0, 1, 1], [], []>} : vector<64x64xbf16>, vector<64x128xbf16>, vector<64x128xf32> -> vector<64x128xf32>
    %c1_49 = arith.constant 1 : index
    %c0_50 = arith.constant 0 : index
    %c0_51 = arith.constant 0 : index
    %96 = vector.load %arg1[%c1_49, %c0_50, %c0_51] : memref<3x64x64xf32, #tpu.memory_space<vmem>>, vector<1x64x64xf32>
    %97 = vector.shape_cast %96 : vector<1x64x64xf32> to vector<64x64xf32>
    %98 = arith.truncf %97 : vector<64x64xf32> to vector<64x64xbf16>
    %99 = vector.extract_strided_slice %90 {offsets = [0, 128], sizes = [64, 128], strides = [1, 1]} : vector<64x384xbf16> to vector<64x128xbf16>
    %cst_52 = arith.constant dense<0.000000e+00> : vector<64x128xf32>
    %100 = tpu.matmul %98, %99, %cst_52 {dimension_numbers = #tpu.dot_dimension_numbers<[1], [0], [0], [1], [0, 0, 1, 1], [], []>} : vector<64x64xbf16>, vector<64x128xbf16>, vector<64x128xf32> -> vector<64x128xf32>
    %101 = arith.addf %95, %100 : vector<64x128xf32>
    %c2_53 = arith.constant 2 : index
    %c0_54 = arith.constant 0 : index
    %c0_55 = arith.constant 0 : index
    %102 = vector.load %arg1[%c2_53, %c0_54, %c0_55] : memref<3x64x64xf32, #tpu.memory_space<vmem>>, vector<1x64x64xf32>
    %103 = vector.shape_cast %102 : vector<1x64x64xf32> to vector<64x64xf32>
    %104 = arith.truncf %103 : vector<64x64xf32> to vector<64x64xbf16>
    %105 = vector.extract_strided_slice %90 {offsets = [0, 256], sizes = [64, 128], strides = [1, 1]} : vector<64x384xbf16> to vector<64x128xbf16>
    %cst_56 = arith.constant dense<0.000000e+00> : vector<64x128xf32>
    %106 = tpu.matmul %104, %105, %cst_56 {dimension_numbers = #tpu.dot_dimension_numbers<[1], [0], [0], [1], [0, 0, 1, 1], [], []>} : vector<64x64xbf16>, vector<64x128xbf16>, vector<64x128xf32> -> vector<64x128xf32>
    %107 = arith.addf %101, %106 : vector<64x128xf32>
    %c0_57 = arith.constant 0 : index
    %c0_58 = arith.constant 0 : index
    %108 = vector.load %arg5[%c0_57, %c0_58] : memref<64x128xf32, #tpu.memory_space<vmem>>, vector<64x128xf32>
    tpu.vector_store %arg5[%c0_57, %c0_58], %107 {strides = array<i32>} : memref<64x128xf32, #tpu.memory_space<vmem>>, vector<64x128xf32>,
    return
  }
}

</mosaic_0001>

<llo_original>
// kernel: tpu_custom_call.1
$region0: #{tpu_custom_call.1}
  #allocation0 [shape = 'u32[]', space=smem, size = 0x4, offset = 0x4, fixed_abs, tag = 'smem constant byte address 0x4 - core index']
  #allocation1 [shape = 'u32[144,128]{1,0:T(1,128)}', space=vmem, size = 0x12000, scoped, tag = 'internal scratch']
  %s0 = inlined_call_operand.vmem [shape: f32[64,16], index: 0, kind: input, shape index: {}]
  %s1 = inlined_call_operand.hbm [shape: f32[3,64,64], index: 1, kind: input, shape index: {}]
  %s2 = inlined_call_operand.vmem [shape: bf16[16,384], index: 2, kind: input, shape index: {}]
  %s3 = inlined_call_operand.hbm [shape: bf16[128,384], index: 3, kind: input, shape index: {}]
  %s4 = inlined_call_operand.hbm [shape: bf16[128,384], index: 4, kind: input, shape index: {}]
  %s5 = inlined_call_operand.hbm [shape: f32[64,128], index: 5, kind: output, shape index: {}]
  %s6 = sld [smem:[#allocation0]]
  $region42: #{tpu_custom_call.1} parent=0
    _
  %s8 = ssub.s32 1, %s6
  %s9 = scalar_select 0, %s8, %s6
  $region1: #{tpu_custom_call.1} parent=0
    #allocation2 [shape = 'u8[98304]{0}', space=vmem, size = 0x18000, scoped, tag = 'input window, operand 1, single buffered']
    #allocation3 [shape = 's32[1]{0}', space=sflag, size = 0x4, scoped, tag = 'scoped memory for tpu_custom_call.1']
    #allocation4 [shape = 's32[1]{0}', space=sflag, size = 0x4, scoped, tag = 'scoped memory for tpu_custom_call.1']
    #allocation5 [shape = 'u8[98304]{0}', space=vmem, size = 0x18000, scoped, tag = 'input window, operand 3, single buffered']
    #allocation6 [shape = 's32[1]{0}', space=sflag, size = 0x4, scoped, tag = 'scoped memory for tpu_custom_call.1']
    #allocation7 [shape = 'u8[98304]{0}', space=vmem, size = 0x18000, scoped, tag = 'input window, operand 4, single buffered']
    #allocation8 [shape = 'u8[32768]{0}', space=vmem, size = 0x8000, scoped, tag = 'output window, operand 0, single buffered']
    %10 = vsyncpa [#allocation3], 0
    %11 = vsyncpa [#allocation6], 0
    %12 = vsyncpa [#allocation4], 0
    // Predicated region
    $region2: #{tpu_custom_call.1} parent=1 // pred_check
      _
    $region3: #{tpu_custom_call.1} parent=1 // pred_check_branch
      %14 = sbr.rel (0) target = $region5
    $region4: #{tpu_custom_call.1} parent=1 // pred_region
      _
    $region5: #{tpu_custom_call.1} parent=1 // pred_fallthru
      _
    // Predicated region
    $region6: #{tpu_custom_call.1} parent=1 // pred_check
      _
    $region7: #{tpu_custom_call.1} parent=1 // pred_check_branch
      %16 = sbr.rel (0) target = $region9
    $region8: #{tpu_custom_call.1} parent=1 // pred_region
      %s18 = ssub.s32 3072, 3072
      %19 = vsyncadd [#allocation3], %s18
      %s20 = sshll.u32 [#allocation2], 4
      %s21 = int_to_ptr.vmem [resolvable:$true] %s20
      %26 = dma.hbm_to_vmem [thread:$0]  %s1, 3072, %s21, [#allocation3], 128, 128, 8
    $region9: #{tpu_custom_call.1} parent=1 // pred_fallthru
      _
    // Predicated region
    $region10: #{tpu_custom_call.1} parent=1 // pred_check
      _
    $region11: #{tpu_custom_call.1} parent=1 // pred_check_branch
      %28 = sbr.rel (0) target = $region13
    $region12: #{tpu_custom_call.1} parent=1 // pred_region
      _
    $region13: #{tpu_custom_call.1} parent=1 // pred_fallthru
      _
    // Predicated region
    $region14: #{tpu_custom_call.1} parent=1 // pred_check
      _
    $region15: #{tpu_custom_call.1} parent=1 // pred_check_branch
      %30 = sbr.rel (0) target = $region17
    $region16: #{tpu_custom_call.1} parent=1 // pred_region
      %s32 = ssub.s32 3072, 3072
      %33 = vsyncadd [#allocation6], %s32
      %s34 = sshll.u32 [#allocation5], 4
      %s35 = int_to_ptr.vmem [resolvable:$true] %s34
      %40 = dma.hbm_to_vmem [thread:$0]  %s3, 3072, %s35, [#allocation6], 192, 192, 12
    $region17: #{tpu_custom_call.1} parent=1 // pred_fallthru
      _
    // Predicated region
    $region18: #{tpu_custom_call.1} parent=1 // pred_check
      _
    $region19: #{tpu_custom_call.1} parent=1 // pred_check_branch
      %42 = sbr.rel (0) target = $region21
    $region20: #{tpu_custom_call.1} parent=1 // pred_region
      %s44 = ssub.s32 3072, 3072
      %45 = vsyncadd [#allocation6], %s44
      %s46 = sshll.u32 [#allocation7], 4
      %s47 = int_to_ptr.vmem [resolvable:$true] %s46
      %52 = dma.hbm_to_vmem [thread:$0]  %s4, 3072, %s47, [#allocation6], 192, 192, 12
    $region21: #{tpu_custom_call.1} parent=1 // pred_fallthru
      _
    // Predicated region
    $region22: #{tpu_custom_call.1} parent=1 // pred_check
      _
    $region23: #{tpu_custom_call.1} parent=1 // pred_check_branch
      %54 = sbr.rel (0) target = $region25
    $region24: #{tpu_custom_call.1} parent=1 // pred_region
      %55 = dma.done [#allocation3], 3072
    $region25: #{tpu_custom_call.1} parent=1 // pred_fallthru
      _
    // Predicated region
    $region26: #{tpu_custom_call.1} parent=1 // pred_check
      _
    $region27: #{tpu_custom_call.1} parent=1 // pred_check_branch
      %57 = sbr.rel (0) target = $region29
    $region28: #{tpu_custom_call.1} parent=1 // pred_region
      %58 = dma.done [#allocation6], 3072
    $region29: #{tpu_custom_call.1} parent=1 // pred_fallthru
      _
    // Predicated region
    $region30: #{tpu_custom_call.1} parent=1 // pred_check
      _
    $region31: #{tpu_custom_call.1} parent=1 // pred_check_branch
      %60 = sbr.rel (0) target = $region33
    $region32: #{tpu_custom_call.1} parent=1 // pred_region
      %61 = dma.done [#allocation6], 3072
    $region33: #{tpu_custom_call.1} parent=1 // pred_fallthru
      _
    %v63 = vld [vmem:[%s0] sm:$0xff]
    %v64 = vld [vmem:[%s0 + $0x8] sm:$0xff]
    %v65 = vld [vmem:[%s0 + $0x10] sm:$0xff]
    %v66 = vld [vmem:[%s0 + $0x18] sm:$0xff]
    %v67 = vld [vmem:[%s0 + $0x20] sm:$0xff]
    %v68 = vld [vmem:[%s0 + $0x28] sm:$0xff]
    %v69 = vld [vmem:[%s0 + $0x30] sm:$0xff]
    %v70 = vld [vmem:[%s0 + $0x38] sm:$0xff]
    %v71 = vpack.c.bf16 %v64, %v63
    %v72 = vpack.c.bf16 %v66, %v65
    %v73 = vpack.c.bf16 %v68, %v67
    %v74 = vpack.c.bf16 %v70, %v69
    %v75 = vld [vmem:[%s2] sm:$0xff]
    %v76 = vld [vmem:[%s2 + $0x8] sm:$0xf]
    %v77 = vld [vmem:[%s2 + $0xc] sm:$0xff]
    %v78 = vld [vmem:[%s2 + $0x14] sm:$0xf]
    %v83 = vunpack.c.l.b16 %v75
    %v84 = vunpack.c.h.b16 %v75
    %v85 = vunpack.c.l.b16 %v76
    %v86 = vunpack.c.l.b16 %v77
    %v87 = vunpack.c.h.b16 %v77
    %v88 = vunpack.c.l.b16 %v78
    %v89 = vpack.c.b16 %v86, %v83
    %v90 = vpack.c.b16 %v87, %v84
    %v91 = vpack.c.b16 %v88, %v85
    %vm95 = vcmask 130048
    %v97 = vsel %vm95, %v71, 0
    %v100 = vsel %vm95, %v72, 0
    %v103 = vsel %vm95, %v73, 0
    %v106 = vsel %vm95, %v74, 0
    %108 = vmatprep.subr.bf16.mxu0 0
    %109 = vmatpush1.bf16.msra.mxu0 0
    %110 = vmatprep.subr.bf16.mxu0 0
    %111 = vmatpush1.bf16.msra.mxu0 0
    %112 = vmatprep.subr.bf16.mxu0 0
    %113 = vmatpush1.bf16.msra.mxu0 0
    %114 = vmatprep.subr.bf16.mxu0 0
    %115 = vmatpush1.bf16.msra.mxu0 0
    %116 = vmatprep.subr.bf16.mxu0 0
    %117 = vmatpush1.bf16.msra.mxu0 0
    %118 = vmatprep.subr.bf16.mxu0 0
    %119 = vmatpush1.bf16.msra.mxu0 0
    %120 = vmatprep.subr.bf16.mxu0 0
    %121 = vmatpush1.bf16.msra.mxu0 0
    %122 = vmatprep.subr.bf16.mxu0 %v90
    %123 = vmatpush1.bf16.msra.mxu0 %v89
    %124 = vmatprep.subr.bf16.mxu0 0
    %125 = vmatpush2.bf16.msra.mxu0 0
    %126 = vmatprep.subr.bf16.mxu0 0
    %127 = vmatpush2.bf16.msra.mxu0 0
    %128 = vmatprep.subr.bf16.mxu0 0
    %129 = vmatpush2.bf16.msra.mxu0 0
    %130 = vmatprep.subr.bf16.mxu0 0
    %131 = vmatpush2.bf16.msra.mxu0 0
    %132 = vmatprep.subr.bf16.mxu0 0
    %133 = vmatpush2.bf16.msra.mxu0 0
    %134 = vmatprep.subr.bf16.mxu0 0
    %135 = vmatpush2.bf16.msra.mxu0 0
    %136 = vmatprep.subr.bf16.mxu0 0
    %137 = vmatpush2.bf16.msra.mxu0 0
    %138 = vmatprep.subr.bf16.mxu0 0
    %139 = vmatpush2.bf16.msra.mxu0 0
    %140 = vmatprep.mubr.bf16.mxu0 0
    %141 = vmatmul.mubr.bf16.gmra.mxu0 %v97
    %v142 = vpop.f32.mrf.mxu0
    %v143 = vadd.f32 0.0, %v142
    %v144 = vpop.f32.mrf.mxu0
    %v145 = vadd.f32 0.0, %v144
    %v146 = vpop.f32.mrf.mxu0
    %v147 = vadd.f32 0.0, %v146
    %v148 = vpop.f32.mrf.mxu0
    %v149 = vadd.f32 0.0, %v148
    %150 = vmatprep.mubr.bf16.mxu0 0
    %151 = vmatmul.mubr.bf16.gmra.mxu0 %v100
    %v152 = vpop.f32.mrf.mxu0
    %v153 = vadd.f32 0.0, %v152
    %v154 = vpop.f32.mrf.mxu0
    %v155 = vadd.f32 0.0, %v154
    %v156 = vpop.f32.mrf.mxu0
    %v157 = vadd.f32 0.0, %v156
    %v158 = vpop.f32.mrf.mxu0
    %v159 = vadd.f32 0.0, %v158
    %160 = vmatprep.mubr.bf16.mxu0 0
    %161 = vmatmul.mubr.bf16.gmra.mxu0 %v103
    %v162 = vpop.f32.mrf.mxu0
    %v163 = vadd.f32 0.0, %v162
    %v164 = vpop.f32.mrf.mxu0
    %v165 = vadd.f32 0.0, %v164
    %v166 = vpop.f32.mrf.mxu0
    %v167 = vadd.f32 0.0, %v166
    %v168 = vpop.f32.mrf.mxu0
    %v169 = vadd.f32 0.0, %v168
    %170 = vmatprep.mubr.bf16.mxu0 0
    %171 = vmatmul.mubr.bf16.gmra.mxu0 %v106
    %v172 = vpop.f32.mrf.mxu0
    %v173 = vadd.f32 0.0, %v172
    %v174 = vpop.f32.mrf.mxu0
    %v175 = vadd.f32 0.0, %v174
    %v176 = vpop.f32.mrf.mxu0
    %v177 = vadd.f32 0.0, %v176
    %v178 = vpop.f32.mrf.mxu0
    %v179 = vadd.f32 0.0, %v178
    %180 = vdwg.mxu0
    %181 = vmatprep.subr.bf16.mxu0 0
    %182 = vmatpush1.bf16.msra.mxu0 0
    %183 = vmatprep.subr.bf16.mxu0 0
    %184 = vmatpush1.bf16.msra.mxu0 0
    %185 = vmatprep.subr.bf16.mxu0 0
    %186 = vmatpush1.bf16.msra.mxu0 0
    %187 = vmatprep.subr.bf16.mxu0 0
    %188 = vmatpush1.bf16.msra.mxu0 0
    %189 = vmatprep.subr.bf16.mxu0 0
    %190 = vmatpush1.bf16.msra.mxu0 0
    %191 = vmatprep.subr.bf16.mxu0 0
    %192 = vmatpush1.bf16.msra.mxu0 0
    %193 = vmatprep.subr.bf16.mxu0 0
    %194 = vmatpush1.bf16.msra.mxu0 0
    %195 = vmatprep.subr.bf16.mxu0 0
    %196 = vmatpush1.bf16.msra.mxu0 %v91
    %197 = vmatprep.subr.bf16.mxu0 0
    %198 = vmatpush2.bf16.msra.mxu0 0
    %199 = vmatprep.subr.bf16.mxu0 0
    %200 = vmatpush2.bf16.msra.mxu0 0
    %201 = vmatprep.subr.bf16.mxu0 0
    %202 = vmatpush2.bf16.msra.mxu0 0
    %203 = vmatprep.subr.bf16.mxu0 0
    %204 = vmatpush2.bf16.msra.mxu0 0
    %205 = vmatprep.subr.bf16.mxu0 0
    %206 = vmatpush2.bf16.msra.mxu0 0
    %207 = vmatprep.subr.bf16.mxu0 0
    %208 = vmatpush2.bf16.msra.mxu0 0
    %209 = vmatprep.subr.bf16.mxu0 0
    %210 = vmatpush2.bf16.msra.mxu0 0
    %211 = vmatprep.subr.bf16.mxu0 0
    %212 = vmatpush2.bf16.msra.mxu0 0
    %213 = vmatprep.mubr.bf16.mxu0 0
    %214 = vmatmul.mubr.bf16.gmra.mxu0 %v97
    %v215 = vpop.f32.mrf.mxu0
    %v216 = vadd.f32 0.0, %v215
    %v217 = vpop.f32.mrf.mxu0
    %v218 = vpop.f32.mrf.mxu0
    %v219 = vadd.f32 0.0, %v218
    %v220 = vpop.f32.mrf.mxu0
    %221 = vmatprep.mubr.bf16.mxu0 0
    %222 = vmatmul.mubr.bf16.gmra.mxu0 %v100
    %v223 = vpop.f32.mrf.mxu0
    %v224 = vadd.f32 0.0, %v223
    %v225 = vpop.f32.mrf.mxu0
    %v226 = vpop.f32.mrf.mxu0
    %v227 = vadd.f32 0.0, %v226
    %v228 = vpop.f32.mrf.mxu0
    %229 = vmatprep.mubr.bf16.mxu0 0
    %230 = vmatmul.mubr.bf16.gmra.mxu0 %v103
    %v231 = vpop.f32.mrf.mxu0
    %v232 = vadd.f32 0.0, %v231
    %v233 = vpop.f32.mrf.mxu0
    %v234 = vpop.f32.mrf.mxu0
    %v235 = vadd.f32 0.0, %v234
    %v236 = vpop.f32.mrf.mxu0
    %237 = vmatprep.mubr.bf16.mxu0 0
    %238 = vmatmul.mubr.bf16.gmra.mxu0 %v106
    %v239 = vpop.f32.mrf.mxu0
    %v240 = vadd.f32 0.0, %v239
    %v241 = vpop.f32.mrf.mxu0
    %v242 = vpop.f32.mrf.mxu0
    %v243 = vadd.f32 0.0, %v242
    %v244 = vpop.f32.mrf.mxu0
    %245 = vdwg.mxu0
    %v246 = vpack.c.bf16 %v147, %v143
    %v247 = vpack.c.bf16 %v149, %v145
    %v248 = vpack.c.bf16 %v219, %v216
    %v249 = vpack.c.bf16 %v157, %v153
    %v250 = vpack.c.bf16 %v159, %v155
    %v251 = vpack.c.bf16 %v227, %v224
    %v252 = vpack.c.bf16 %v167, %v163
    %v253 = vpack.c.bf16 %v169, %v165
    %v254 = vpack.c.bf16 %v235, %v232
    %v255 = vpack.c.bf16 %v177, %v173
    %v256 = vpack.c.bf16 %v179, %v175
    %v257 = vpack.c.bf16 %v243, %v240
    %v258 = vld [vmem:[#allocation2] sm:$0xff]
    %v259 = vld [vmem:[#allocation2 + $0x8] sm:$0xff]
    %v260 = vld [vmem:[#allocation2 + $0x10] sm:$0xff]
    %v261 = vld [vmem:[#allocation2 + $0x18] sm:$0xff]
    %v262 = vld [vmem:[#allocation2 + $0x20] sm:$0xff]
    %v263 = vld [vmem:[#allocation2 + $0x28] sm:$0xff]
    %v264 = vld [vmem:[#allocation2 + $0x30] sm:$0xff]
    %v265 = vld [vmem:[#allocation2 + $0x38] sm:$0xff]
    %v266 = vpack.c.bf16 %v259, %v258
    %v267 = vpack.c.bf16 %v261, %v260
    %v268 = vpack.c.bf16 %v263, %v262
    %v269 = vpack.c.bf16 %v265, %v264
    %s270 = scalar_lea.vmem [#allocation2], 64
    %v271 = vld [vmem:[%s270] sm:$0xff]
    %v272 = vld [vmem:[%s270 + $0x8] sm:$0xff]
    %v273 = vld [vmem:[%s270 + $0x10] sm:$0xff]
    %v274 = vld [vmem:[%s270 + $0x18] sm:$0xff]
    %v275 = vld [vmem:[%s270 + $0x20] sm:$0xff]
    %v276 = vld [vmem:[%s270 + $0x28] sm:$0xff]
    %v277 = vld [vmem:[%s270 + $0x30] sm:$0xff]
    %v278 = vld [vmem:[%s270 + $0x38] sm:$0xff]
    %v279 = vpack.c.bf16 %v272, %v271
    %v280 = vpack.c.bf16 %v274, %v273
    %v281 = vpack.c.bf16 %v276, %v275
    %v282 = vpack.c.bf16 %v278, %v277
    %vm283 = vcmask 523264
    %v285 = vsel %vm283, %v279, 0
    %v288 = vsel %vm283, %v280, 0
    %v291 = vsel %vm283, %v281, 0
    %v294 = vsel %vm283, %v282, 0
    %296 = vmatprep.subr.bf16.mxu0 0
    %297 = vmatpush1.bf16.msra.mxu0 0
    %298 = vmatprep.subr.bf16.mxu0 0
    %299 = vmatpush1.bf16.msra.mxu0 0
    %300 = vmatprep.subr.bf16.mxu0 0
    %301 = vmatpush1.bf16.msra.mxu0 0
    %302 = vmatprep.subr.bf16.mxu0 0
    %303 = vmatpush1.bf16.msra.mxu0 0
    %304 = vmatprep.subr.bf16.mxu0 0
    %305 = vmatpush1.bf16.msra.mxu0 %v256
    %306 = vmatprep.subr.bf16.mxu0 0
    %307 = vmatpush1.bf16.msra.mxu0 %v253
    %308 = vmatprep.subr.bf16.mxu0 0
    %309 = vmatpush1.bf16.msra.mxu0 %v250
    %310 = vmatprep.subr.bf16.mxu0 0
    %311 = vmatpush1.bf16.msra.mxu0 %v247
    %312 = vmatprep.subr.bf16.mxu0 0
    %313 = vmatpush2.bf16.msra.mxu0 0
    %314 = vmatprep.subr.bf16.mxu0 0
    %315 = vmatpush2.bf16.msra.mxu0 0
    %316 = vmatprep.subr.bf16.mxu0 0
    %317 = vmatpush2.bf16.msra.mxu0 0
    %318 = vmatprep.subr.bf16.mxu0 0
    %319 = vmatpush2.bf16.msra.mxu0 0
    %320 = vmatprep.subr.bf16.mxu0 0
    %321 = vmatpush2.bf16.msra.mxu0 0
    %322 = vmatprep.subr.bf16.mxu0 0
    %323 = vmatpush2.bf16.msra.mxu0 0
    %324 = vmatprep.subr.bf16.mxu0 0
    %325 = vmatpush2.bf16.msra.mxu0 0
    %326 = vmatprep.subr.bf16.mxu0 0
    %327 = vmatpush2.bf16.msra.mxu0 0
    %328 = vmatprep.mubr.bf16.mxu0 0
    %329 = vmatmul.mubr.bf16.gmra.mxu0 %v285
    %v330 = vpop.f32.mrf.mxu0
    %v331 = vadd.f32 0.0, %v330
    %v332 = vpop.f32.mrf.mxu0
    %v333 = vpop.f32.mrf.mxu0
    %v334 = vadd.f32 0.0, %v333
    %v335 = vpop.f32.mrf.mxu0
    %336 = vmatprep.mubr.bf16.mxu0 0
    %337 = vmatmul.mubr.bf16.gmra.mxu0 %v288
    %v338 = vpop.f32.mrf.mxu0
    %v339 = vadd.f32 0.0, %v338
    %v340 = vpop.f32.mrf.mxu0
    %v341 = vpop.f32.mrf.mxu0
    %v342 = vadd.f32 0.0, %v341
    %v343 = vpop.f32.mrf.mxu0
    %344 = vmatprep.mubr.bf16.mxu0 0
    %345 = vmatmul.mubr.bf16.gmra.mxu0 %v291
    %v346 = vpop.f32.mrf.mxu0
    %v347 = vadd.f32 0.0, %v346
    %v348 = vpop.f32.mrf.mxu0
    %v349 = vpop.f32.mrf.mxu0
    %v350 = vadd.f32 0.0, %v349
    %v351 = vpop.f32.mrf.mxu0
    %352 = vmatprep.mubr.bf16.mxu0 0
    %353 = vmatmul.mubr.bf16.gmra.mxu0 %v294
    %v354 = vpop.f32.mrf.mxu0
    %v355 = vadd.f32 0.0, %v354
    %v356 = vpop.f32.mrf.mxu0
    %v357 = vpop.f32.mrf.mxu0
    %v358 = vadd.f32 0.0, %v357
    %v359 = vpop.f32.mrf.mxu0
    %360 = vdwg.mxu0
    %v362 = vsel %vm283, %v266, 0
    %v365 = vsel %vm283, %v267, 0
    %v368 = vsel %vm283, %v268, 0
    %v371 = vsel %vm283, %v269, 0
    %373 = vmatprep.subr.bf16.mxu0 0
    %374 = vmatpush1.bf16.msra.mxu0 0
    %375 = vmatprep.subr.bf16.mxu0 0
    %376 = vmatpush1.bf16.msra.mxu0 0
    %377 = vmatprep.subr.bf16.mxu0 0
    %378 = vmatpush1.bf16.msra.mxu0 0
    %379 = vmatprep.subr.bf16.mxu0 0
    %380 = vmatpush1.bf16.msra.mxu0 0
    %381 = vmatprep.subr.bf16.mxu0 0
    %382 = vmatpush1.bf16.msra.mxu0 %v255
    %383 = vmatprep.subr.bf16.mxu0 0
    %384 = vmatpush1.bf16.msra.mxu0 %v252
    %385 = vmatprep.subr.bf16.mxu0 0
    %386 = vmatpush1.bf16.msra.mxu0 %v249
    %387 = vmatprep.subr.bf16.mxu0 0
    %388 = vmatpush1.bf16.msra.mxu0 %v246
    %389 = vmatprep.subr.bf16.mxu0 0
    %390 = vmatpush2.bf16.msra.mxu0 0
    %391 = vmatprep.subr.bf16.mxu0 0
    %392 = vmatpush2.bf16.msra.mxu0 0
    %393 = vmatprep.subr.bf16.mxu0 0
    %394 = vmatpush2.bf16.msra.mxu0 0
    %395 = vmatprep.subr.bf16.mxu0 0
    %396 = vmatpush2.bf16.msra.mxu0 0
    %397 = vmatprep.subr.bf16.mxu0 0
    %398 = vmatpush2.bf16.msra.mxu0 0
    %399 = vmatprep.subr.bf16.mxu0 0
    %400 = vmatpush2.bf16.msra.mxu0 0
    %401 = vmatprep.subr.bf16.mxu0 0
    %402 = vmatpush2.bf16.msra.mxu0 0
    %403 = vmatprep.subr.bf16.mxu0 0
    %404 = vmatpush2.bf16.msra.mxu0 0
    %405 = vmatprep.mubr.bf16.mxu0 0
    %406 = vmatmul.mubr.bf16.gmra.mxu0 %v362
    %v407 = vpop.f32.mrf.mxu0
    %v408 = vadd.f32 %v331, %v407
    %v409 = vpop.f32.mrf.mxu0
    %v410 = vpop.f32.mrf.mxu0
    %v411 = vadd.f32 %v334, %v410
    %v412 = vpop.f32.mrf.mxu0
    %413 = vmatprep.mubr.bf16.mxu0 0
    %414 = vmatmul.mubr.bf16.gmra.mxu0 %v365
    %v415 = vpop.f32.mrf.mxu0
    %v416 = vadd.f32 %v339, %v415
    %v417 = vpop.f32.mrf.mxu0
    %v418 = vpop.f32.mrf.mxu0
    %v419 = vadd.f32 %v342, %v418
    %v420 = vpop.f32.mrf.mxu0
    %421 = vmatprep.mubr.bf16.mxu0 0
    %422 = vmatmul.mubr.bf16.gmra.mxu0 %v368
    %v423 = vpop.f32.mrf.mxu0
    %v424 = vadd.f32 %v347, %v423
    %v425 = vpop.f32.mrf.mxu0
    %v426 = vpop.f32.mrf.mxu0
    %v427 = vadd.f32 %v350, %v426
    %v428 = vpop.f32.mrf.mxu0
    %429 = vmatprep.mubr.bf16.mxu0 0
    %430 = vmatmul.mubr.bf16.gmra.mxu0 %v371
    %v431 = vpop.f32.mrf.mxu0
    %v432 = vadd.f32 %v355, %v431
    %v433 = vpop.f32.mrf.mxu0
    %v434 = vpop.f32.mrf.mxu0
    %v435 = vadd.f32 %v358, %v434
    %v436 = vpop.f32.mrf.mxu0
    %437 = vdwg.mxu0
    %s438 = scalar_lea.vmem [#allocation2], 128
    %v439 = vld [vmem:[%s438] sm:$0xff]
    %v440 = vld [vmem:[%s438 + $0x8] sm:$0xff]
    %v441 = vld [vmem:[%s438 + $0x10] sm:$0xff]
    %v442 = vld [vmem:[%s438 + $0x18] sm:$0xff]
    %v443 = vld [vmem:[%s438 + $0x20] sm:$0xff]
    %v444 = vld [vmem:[%s438 + $0x28] sm:$0xff]
    %v445 = vld [vmem:[%s438 + $0x30] sm:$0xff]
    %v446 = vld [vmem:[%s438 + $0x38] sm:$0xff]
    %v447 = vpack.c.bf16 %v440, %v439
    %v448 = vpack.c.bf16 %v442, %v441
    %v449 = vpack.c.bf16 %v444, %v443
    %v450 = vpack.c.bf16 %v446, %v445
    %v452 = vsel %vm283, %v447, 0
    %v455 = vsel %vm283, %v448, 0
    %v458 = vsel %vm283, %v449, 0
    %v461 = vsel %vm283, %v450, 0
    %463 = vmatprep.subr.bf16.mxu0 0
    %464 = vmatpush1.bf16.msra.mxu0 0
    %465 = vmatprep.subr.bf16.mxu0 0
    %466 = vmatpush1.bf16.msra.mxu0 0
    %467 = vmatprep.subr.bf16.mxu0 0
    %468 = vmatpush1.bf16.msra.mxu0 0
    %469 = vmatprep.subr.bf16.mxu0 0
    %470 = vmatpush1.bf16.msra.mxu0 0
    %471 = vmatprep.subr.bf16.mxu0 0
    %472 = vmatpush1.bf16.msra.mxu0 %v257
    %473 = vmatprep.subr.bf16.mxu0 0
    %474 = vmatpush1.bf16.msra.mxu0 %v254
    %475 = vmatprep.subr.bf16.mxu0 0
    %476 = vmatpush1.bf16.msra.mxu0 %v251
    %477 = vmatprep.subr.bf16.mxu0 0
    %478 = vmatpush1.bf16.msra.mxu0 %v248
    %479 = vmatprep.subr.bf16.mxu0 0
    %480 = vmatpush2.bf16.msra.mxu0 0
    %481 = vmatprep.subr.bf16.mxu0 0
    %482 = vmatpush2.bf16.msra.mxu0 0
    %483 = vmatprep.subr.bf16.mxu0 0
    %484 = vmatpush2.bf16.msra.mxu0 0
    %485 = vmatprep.subr.bf16.mxu0 0
    %486 = vmatpush2.bf16.msra.mxu0 0
    %487 = vmatprep.subr.bf16.mxu0 0
    %488 = vmatpush2.bf16.msra.mxu0 0
    %489 = vmatprep.subr.bf16.mxu0 0
    %490 = vmatpush2.bf16.msra.mxu0 0
    %491 = vmatprep.subr.bf16.mxu0 0
    %492 = vmatpush2.bf16.msra.mxu0 0
    %493 = vmatprep.subr.bf16.mxu0 0
    %494 = vmatpush2.bf16.msra.mxu0 0
    %495 = vmatprep.mubr.bf16.mxu0 0
    %496 = vmatmul.mubr.bf16.gmra.mxu0 %v452
    %v497 = vpop.f32.mrf.mxu0
    %v498 = vadd.f32 0.0, %v497
    %v499 = vpop.f32.mrf.mxu0
    %v500 = vpop.f32.mrf.mxu0
    %v501 = vadd.f32 0.0, %v500
    %v502 = vpop.f32.mrf.mxu0
    %503 = vmatprep.mubr.bf16.mxu0 0
    %504 = vmatmul.mubr.bf16.gmra.mxu0 %v455
    %v505 = vpop.f32.mrf.mxu0
    %v506 = vadd.f32 0.0, %v505
    %v507 = vpop.f32.mrf.mxu0
    %v508 = vpop.f32.mrf.mxu0
    %v509 = vadd.f32 0.0, %v508
    %v510 = vpop.f32.mrf.mxu0
    %511 = vmatprep.mubr.bf16.mxu0 0
    %512 = vmatmul.mubr.bf16.gmra.mxu0 %v458
    %v513 = vpop.f32.mrf.mxu0
    %v514 = vadd.f32 0.0, %v513
    %v515 = vpop.f32.mrf.mxu0
    %v516 = vpop.f32.mrf.mxu0
    %v517 = vadd.f32 0.0, %v516
    %v518 = vpop.f32.mrf.mxu0
    %519 = vmatprep.mubr.bf16.mxu0 0
    %520 = vmatmul.mubr.bf16.gmra.mxu0 %v461
    %v521 = vpop.f32.mrf.mxu0
    %v522 = vadd.f32 0.0, %v521
    %v523 = vpop.f32.mrf.mxu0
    %v524 = vpop.f32.mrf.mxu0
    %v525 = vadd.f32 0.0, %v524
    %v526 = vpop.f32.mrf.mxu0
    %527 = vdwg.mxu0
    %v528 = vadd.f32 %v408, %v498
    %v529 = vadd.f32 %v411, %v501
    %v530 = vadd.f32 %v416, %v506
    %v531 = vadd.f32 %v419, %v509
    %v532 = vadd.f32 %v424, %v514
    %v533 = vadd.f32 %v427, %v517
    %v534 = vadd.f32 %v432, %v522
    %v535 = vadd.f32 %v435, %v525
    %v536 = vmax.f32 %v528, 0.0
    %v537 = vmax.f32 %v529, 0.0
    %v538 = vmax.f32 %v530, 0.0
    %v539 = vmax.f32 %v531, 0.0
    %v540 = vmax.f32 %v532, 0.0
    %v541 = vmax.f32 %v533, 0.0
    %v542 = vmax.f32 %v534, 0.0
    %v543 = vmax.f32 %v535, 0.0
    %v544 = vadd.f32 %v536, %v537
    %v545 = vadd.f32 %v544, %v538
    %v546 = vadd.f32 %v545, %v539
    %v547 = vadd.f32 %v546, %v540
    %v548 = vadd.f32 %v547, %v541
    %v549 = vadd.f32 %v548, %v542
    %v550 = vadd.f32 %v549, %v543
    %v551 = vrot.slane %v550, 4
    %v552 = vadd.f32 %v550, %v551
    %v553 = vrot.slane %v552, 2
    %v554 = vadd.f32 %v552, %v553
    %v555 = vrot.slane %v554, 1
    %v556 = vadd.f32 %v554, %v555
    %v557 = vmul.f32 %v536, %v536
    %v558 = vmul.f32 %v537, %v537
    %v559 = vmul.f32 %v538, %v538
    %v560 = vmul.f32 %v539, %v539
    %v561 = vmul.f32 %v540, %v540
    %v562 = vmul.f32 %v541, %v541
    %v563 = vmul.f32 %v542, %v542
    %v564 = vmul.f32 %v543, %v543
    %v565 = vadd.f32 %v557, %v558
    %v566 = vadd.f32 %v565, %v559
    %v567 = vadd.f32 %v566, %v560
    %v568 = vadd.f32 %v567, %v561
    %v569 = vadd.f32 %v568, %v562
    %v570 = vadd.f32 %v569, %v563
    %v571 = vadd.f32 %v570, %v564
    %v572 = vrot.slane %v571, 4
    %v573 = vadd.f32 %v571, %v572
    %v574 = vrot.slane %v573, 2
    %v575 = vadd.f32 %v573, %v574
    %v576 = vrot.slane %v575, 1
    %v577 = vadd.f32 %v575, %v576
    %v578 = vmul.f32 %v556, 0.015625
    %v579 = vmul.f32 %v577, 0.015625
    %v580 = vmul.f32 %v578, %v578
    %v581 = vsub.f32 %v579, %v580
    %v582 = vmax.f32 %v581, 0.0
    %v583 = vsub.f32 %v536, %v578
    %v584 = vsub.f32 %v537, %v578
    %v585 = vsub.f32 %v538, %v578
    %v586 = vsub.f32 %v539, %v578
    %v587 = vsub.f32 %v540, %v578
    %v588 = vsub.f32 %v541, %v578
    %v589 = vsub.f32 %v542, %v578
    %v590 = vsub.f32 %v543, %v578
    %v591 = vadd.f32 %v582, 1e-05
    %v592 = vrsqrt.pop %v591
    %v593 = vmul.f32 %v583, %v592
    %v594 = vmul.f32 %v584, %v592
    %v595 = vmul.f32 %v585, %v592
    %v596 = vmul.f32 %v586, %v592
    %v597 = vmul.f32 %v587, %v592
    %v598 = vmul.f32 %v588, %v592
    %v599 = vmul.f32 %v589, %v592
    %v600 = vmul.f32 %v590, %v592
    %v601 = vpack.c.bf16 %v594, %v593
    %v602 = vpack.c.bf16 %v596, %v595
    %v603 = vpack.c.bf16 %v598, %v597
    %v604 = vpack.c.bf16 %v600, %v599
    %v605 = vld [vmem:[#allocation5] sm:$0xff]
    %v606 = vld [vmem:[#allocation5 + $0x8] sm:$0xf]
    %v607 = vld [vmem:[#allocation5 + $0xc] sm:$0xff]
    %v608 = vld [vmem:[#allocation5 + $0x14] sm:$0xf]
    %v609 = vld [vmem:[#allocation5 + $0x18] sm:$0xff]
    %v610 = vld [vmem:[#allocation5 + $0x20] sm:$0xf]
    %v611 = vld [vmem:[#allocation5 + $0x24] sm:$0xff]
    %v612 = vld [vmem:[#allocation5 + $0x2c] sm:$0xf]
    %v613 = vld [vmem:[#allocation5 + $0x30] sm:$0xff]
    %v614 = vld [vmem:[#allocation5 + $0x38] sm:$0xf]
    %v615 = vld [vmem:[#allocation5 + $0x3c] sm:$0xff]
    %v616 = vld [vmem:[#allocation5 + $0x44] sm:$0xf]
    %v617 = vld [vmem:[#allocation5 + $0x48] sm:$0xff]
    %v618 = vld [vmem:[#allocation5 + $0x50] sm:$0xf]
    %v619 = vld [vmem:[#allocation5 + $0x54] sm:$0xff]
    %v620 = vld [vmem:[#allocation5 + $0x5c] sm:$0xf]
    %v621 = vld [vmem:[#allocation5 + $0x60] sm:$0xff]
    %v622 = vld [vmem:[#allocation5 + $0x68] sm:$0xf]
    %v623 = vld [vmem:[#allocation5 + $0x6c] sm:$0xff]
    %v624 = vld [vmem:[#allocation5 + $0x74] sm:$0xf]
    %v625 = vld [vmem:[#allocation5 + $0x78] sm:$0xff]
    %v626 = vld [vmem:[#allocation5 + $0x80] sm:$0xf]
    %v627 = vld [vmem:[#allocation5 + $0x84] sm:$0xff]
    %v628 = vld [vmem:[#allocation5 + $0x8c] sm:$0xf]
    %v629 = vld [vmem:[#allocation5 + $0x90] sm:$0xff]
    %v630 = vld [vmem:[#allocation5 + $0x98] sm:$0xf]
    %v631 = vld [vmem:[#allocation5 + $0x9c] sm:$0xff]
    %v632 = vld [vmem:[#allocation5 + $0xa4] sm:$0xf]
    %v633 = vld [vmem:[#allocation5 + $0xa8] sm:$0xff]
    %v634 = vld [vmem:[#allocation5 + $0xb0] sm:$0xf]
    %v635 = vld [vmem:[#allocation5 + $0xb4] sm:$0xff]
    %v636 = vld [vmem:[#allocation5 + $0xbc] sm:$0xf]
    %v669 = vunpack.c.l.b16 %v605
    %v670 = vunpack.c.h.b16 %v605
    %v671 = vunpack.c.l.b16 %v606
    %v672 = vunpack.c.l.b16 %v607
    %v673 = vunpack.c.h.b16 %v607
    %v674 = vunpack.c.l.b16 %v608
    %v675 = vunpack.c.l.b16 %v609
    %v676 = vunpack.c.h.b16 %v609
    %v677 = vunpack.c.l.b16 %v610
    %v678 = vunpack.c.l.b16 %v611
    %v679 = vunpack.c.h.b16 %v611
    %v680 = vunpack.c.l.b16 %v612
    %v681 = vunpack.c.l.b16 %v613
    %v682 = vunpack.c.h.b16 %v613
    %v683 = vunpack.c.l.b16 %v614
    %v684 = vunpack.c.l.b16 %v615
    %v685 = vunpack.c.h.b16 %v615
    %v686 = vunpack.c.l.b16 %v616
    %v687 = vunpack.c.l.b16 %v617
    %v688 = vunpack.c.h.b16 %v617
    %v689 = vunpack.c.l.b16 %v618
    %v690 = vunpack.c.l.b16 %v619
    %v691 = vunpack.c.h.b16 %v619
    %v692 = vunpack.c.l.b16 %v620
    %v693 = vunpack.c.l.b16 %v621
    %v694 = vunpack.c.h.b16 %v621
    %v695 = vunpack.c.l.b16 %v622
    %v696 = vunpack.c.l.b16 %v623
    %v697 = vunpack.c.h.b16 %v623
    %v698 = vunpack.c.l.b16 %v624
    %v699 = vunpack.c.l.b16 %v625
    %v700 = vunpack.c.h.b16 %v625
    %v701 = vunpack.c.l.b16 %v626
    %v702 = vunpack.c.l.b16 %v627
    %v703 = vunpack.c.h.b16 %v627
    %v704 = vunpack.c.l.b16 %v628
    %v705 = vunpack.c.l.b16 %v629
    %v706 = vunpack.c.h.b16 %v629
    %v707 = vunpack.c.l.b16 %v630
    %v708 = vunpack.c.l.b16 %v631
    %v709 = vunpack.c.h.b16 %v631
    %v710 = vunpack.c.l.b16 %v632
    %v711 = vunpack.c.l.b16 %v633
    %v712 = vunpack.c.h.b16 %v633
    %v713 = vunpack.c.l.b16 %v634
    %v714 = vunpack.c.l.b16 %v635
    %v715 = vunpack.c.h.b16 %v635
    %v716 = vunpack.c.l.b16 %v636
    %v717 = vpack.c.b16 %v672, %v669
    %v718 = vpack.c.b16 %v673, %v670
    %v719 = vpack.c.b16 %v674, %v671
    %v720 = vpack.c.b16 %v678, %v675
    %v721 = vpack.c.b16 %v679, %v676
    %v722 = vpack.c.b16 %v680, %v677
    %v723 = vpack.c.b16 %v684, %v681
    %v724 = vpack.c.b16 %v685, %v682
    %v725 = vpack.c.b16 %v686, %v683
    %v726 = vpack.c.b16 %v690, %v687
    %v727 = vpack.c.b16 %v691, %v688
    %v728 = vpack.c.b16 %v692, %v689
    %v729 = vpack.c.b16 %v696, %v693
    %v730 = vpack.c.b16 %v697, %v694
    %v731 = vpack.c.b16 %v698, %v695
    %v732 = vpack.c.b16 %v702, %v699
    %v733 = vpack.c.b16 %v703, %v700
    %v734 = vpack.c.b16 %v704, %v701
    %v735 = vpack.c.b16 %v708, %v705
    %v736 = vpack.c.b16 %v709, %v706
    %v737 = vpack.c.b16 %v710, %v707
    %v738 = vpack.c.b16 %v714, %v711
    %v739 = vpack.c.b16 %v715, %v712
    %v740 = vpack.c.b16 %v716, %v713
    %765 = vmatprep.subr.bf16.mxu0 %v739
    %766 = vmatpush1.bf16.msra.mxu0 %v738
    %767 = vmatprep.subr.bf16.mxu0 %v736
    %768 = vmatpush1.bf16.msra.mxu0 %v735
    %769 = vmatprep.subr.bf16.mxu0 %v733
    %770 = vmatpush1.bf16.msra.mxu0 %v732
    %771 = vmatprep.subr.bf16.mxu0 %v730
    %772 = vmatpush1.bf16.msra.mxu0 %v729
    %773 = vmatprep.subr.bf16.mxu0 %v727
    %774 = vmatpush1.bf16.msra.mxu0 %v726
    %775 = vmatprep.subr.bf16.mxu0 %v724
    %776 = vmatpush1.bf16.msra.mxu0 %v723
    %777 = vmatprep.subr.bf16.mxu0 %v721
    %778 = vmatpush1.bf16.msra.mxu0 %v720
    %779 = vmatprep.subr.bf16.mxu0 %v718
    %780 = vmatpush1.bf16.msra.mxu0 %v717
    %781 = vmatprep.subr.bf16.mxu0 0
    %782 = vmatpush2.bf16.msra.mxu0 0
    %783 = vmatprep.subr.bf16.mxu0 0
    %784 = vmatpush2.bf16.msra.mxu0 0
    %785 = vmatprep.subr.bf16.mxu0 0
    %786 = vmatpush2.bf16.msra.mxu0 0
    %787 = vmatprep.subr.bf16.mxu0 0
    %788 = vmatpush2.bf16.msra.mxu0 0
    %789 = vmatprep.subr.bf16.mxu0 0
    %790 = vmatpush2.bf16.msra.mxu0 0
    %791 = vmatprep.subr.bf16.mxu0 0
    %792 = vmatpush2.bf16.msra.mxu0 0
    %793 = vmatprep.subr.bf16.mxu0 0
    %794 = vmatpush2.bf16.msra.mxu0 0
    %795 = vmatprep.subr.bf16.mxu0 0
    %796 = vmatpush2.bf16.msra.mxu0 0
    %797 = vmatprep.mubr.bf16.mxu0 0
    %798 = vmatmul.mubr.bf16.gmra.mxu0 %v601
    %v799 = vpop.f32.mrf.mxu0
    %v800 = vadd.f32 0.0, %v799
    %v801 = vpop.f32.mrf.mxu0
    %v802 = vadd.f32 0.0, %v801
    %v803 = vpop.f32.mrf.mxu0
    %v804 = vadd.f32 0.0, %v803
    %v805 = vpop.f32.mrf.mxu0
    %v806 = vadd.f32 0.0, %v805
    %807 = vmatprep.mubr.bf16.mxu0 0
    %808 = vmatmul.mubr.bf16.gmra.mxu0 %v602
    %v809 = vpop.f32.mrf.mxu0
    %v810 = vadd.f32 0.0, %v809
    %v811 = vpop.f32.mrf.mxu0
    %v812 = vadd.f32 0.0, %v811
    %v813 = vpop.f32.mrf.mxu0
    %v814 = vadd.f32 0.0, %v813
    %v815 = vpop.f32.mrf.mxu0
    %v816 = vadd.f32 0.0, %v815
    %817 = vmatprep.mubr.bf16.mxu0 0
    %818 = vmatmul.mubr.bf16.gmra.mxu0 %v603
    %v819 = vpop.f32.mrf.mxu0
    %v820 = vadd.f32 0.0, %v819
    %v821 = vpop.f32.mrf.mxu0
    %v822 = vadd.f32 0.0, %v821
    %v823 = vpop.f32.mrf.mxu0
    %v824 = vadd.f32 0.0, %v823
    %v825 = vpop.f32.mrf.mxu0
    %v826 = vadd.f32 0.0, %v825
    %827 = vmatprep.mubr.bf16.mxu0 0
    %828 = vmatmul.mubr.bf16.gmra.mxu0 %v604
    %v829 = vpop.f32.mrf.mxu0
    %v830 = vadd.f32 0.0, %v829
    %v831 = vpop.f32.mrf.mxu0
    %v832 = vadd.f32 0.0, %v831
    %v833 = vpop.f32.mrf.mxu0
    %v834 = vadd.f32 0.0, %v833
    %v835 = vpop.f32.mrf.mxu0
    %v836 = vadd.f32 0.0, %v835
    %837 = vdwg.mxu0
    %838 = vmatprep.subr.bf16.mxu0 0
    %839 = vmatpush1.bf16.msra.mxu0 %v740
    %840 = vmatprep.subr.bf16.mxu0 0
    %841 = vmatpush1.bf16.msra.mxu0 %v737
    %842 = vmatprep.subr.bf16.mxu0 0
    %843 = vmatpush1.bf16.msra.mxu0 %v734
    %844 = vmatprep.subr.bf16.mxu0 0
    %845 = vmatpush1.bf16.msra.mxu0 %v731
    %846 = vmatprep.subr.bf16.mxu0 0
    %847 = vmatpush1.bf16.msra.mxu0 %v728
    %848 = vmatprep.subr.bf16.mxu0 0
    %849 = vmatpush1.bf16.msra.mxu0 %v725
    %850 = vmatprep.subr.bf16.mxu0 0
    %851 = vmatpush1.bf16.msra.mxu0 %v722
    %852 = vmatprep.subr.bf16.mxu0 0
    %853 = vmatpush1.bf16.msra.mxu0 %v719
    %854 = vmatprep.subr.bf16.mxu0 0
    %855 = vmatpush2.bf16.msra.mxu0 0
    %856 = vmatprep.subr.bf16.mxu0 0
    %857 = vmatpush2.bf16.msra.mxu0 0
    %858 = vmatprep.subr.bf16.mxu0 0
    %859 = vmatpush2.bf16.msra.mxu0 0
    %860 = vmatprep.subr.bf16.mxu0 0
    %861 = vmatpush2.bf16.msra.mxu0 0
    %862 = vmatprep.subr.bf16.mxu0 0
    %863 = vmatpush2.bf16.msra.mxu0 0
    %864 = vmatprep.subr.bf16.mxu0 0
    %865 = vmatpush2.bf16.msra.mxu0 0
    %866 = vmatprep.subr.bf16.mxu0 0
    %867 = vmatpush2.bf16.msra.mxu0 0
    %868 = vmatprep.subr.bf16.mxu0 0
    %869 = vmatpush2.bf16.msra.mxu0 0
    %870 = vmatprep.mubr.bf16.mxu0 0
    %871 = vmatmul.mubr.bf16.gmra.mxu0 %v601
    %v872 = vpop.f32.mrf.mxu0
    %v873 = vadd.f32 0.0, %v872
    %v874 = vpop.f32.mrf.mxu0
    %v875 = vpop.f32.mrf.mxu0
    %v876 = vadd.f32 0.0, %v875
    %v877 = vpop.f32.mrf.mxu0
    %878 = vmatprep.mubr.bf16.mxu0 0
    %879 = vmatmul.mubr.bf16.gmra.mxu0 %v602
    %v880 = vpop.f32.mrf.mxu0
    %v881 = vadd.f32 0.0, %v880
    %v882 = vpop.f32.mrf.mxu0
    %v883 = vpop.f32.mrf.mxu0
    %v884 = vadd.f32 0.0, %v883
    %v885 = vpop.f32.mrf.mxu0
    %886 = vmatprep.mubr.bf16.mxu0 0
    %887 = vmatmul.mubr.bf16.gmra.mxu0 %v603
    %v888 = vpop.f32.mrf.mxu0
    %v889 = vadd.f32 0.0, %v888
    %v890 = vpop.f32.mrf.mxu0
    %v891 = vpop.f32.mrf.mxu0
    %v892 = vadd.f32 0.0, %v891
    %v893 = vpop.f32.mrf.mxu0
    %894 = vmatprep.mubr.bf16.mxu0 0
    %895 = vmatmul.mubr.bf16.gmra.mxu0 %v604
    %v896 = vpop.f32.mrf.mxu0
    %v897 = vadd.f32 0.0, %v896
    %v898 = vpop.f32.mrf.mxu0
    %v899 = vpop.f32.mrf.mxu0
    %v900 = vadd.f32 0.0, %v899
    %v901 = vpop.f32.mrf.mxu0
    %902 = vdwg.mxu0
    %v903 = vpack.c.bf16 %v804, %v800
    %v904 = vpack.c.bf16 %v806, %v802
    %v905 = vpack.c.bf16 %v876, %v873
    %v906 = vpack.c.bf16 %v814, %v810
    %v907 = vpack.c.bf16 %v816, %v812
    %v908 = vpack.c.bf16 %v884, %v881
    %v909 = vpack.c.bf16 %v824, %v820
    %v910 = vpack.c.bf16 %v826, %v822
    %v911 = vpack.c.bf16 %v892, %v889
    %v912 = vpack.c.bf16 %v834, %v830
    %v913 = vpack.c.bf16 %v836, %v832
    %v914 = vpack.c.bf16 %v900, %v897
    %915 = vmatprep.subr.bf16.mxu0 0
    %916 = vmatpush1.bf16.msra.mxu0 0
    %917 = vmatprep.subr.bf16.mxu0 0
    %918 = vmatpush1.bf16.msra.mxu0 0
    %919 = vmatprep.subr.bf16.mxu0 0
    %920 = vmatpush1.bf16.msra.mxu0 0
    %921 = vmatprep.subr.bf16.mxu0 0
    %922 = vmatpush1.bf16.msra.mxu0 0
    %923 = vmatprep.subr.bf16.mxu0 0
    %924 = vmatpush1.bf16.msra.mxu0 %v913
    %925 = vmatprep.subr.bf16.mxu0 0
    %926 = vmatpush1.bf16.msra.mxu0 %v910
    %927 = vmatprep.subr.bf16.mxu0 0
    %928 = vmatpush1.bf16.msra.mxu0 %v907
    %929 = vmatprep.subr.bf16.mxu0 0
    %930 = vmatpush1.bf16.msra.mxu0 %v904
    %931 = vmatprep.subr.bf16.mxu0 0
    %932 = vmatpush2.bf16.msra.mxu0 0
    %933 = vmatprep.subr.bf16.mxu0 0
    %934 = vmatpush2.bf16.msra.mxu0 0
    %935 = vmatprep.subr.bf16.mxu0 0
    %936 = vmatpush2.bf16.msra.mxu0 0
    %937 = vmatprep.subr.bf16.mxu0 0
    %938 = vmatpush2.bf16.msra.mxu0 0
    %939 = vmatprep.subr.bf16.mxu0 0
    %940 = vmatpush2.bf16.msra.mxu0 0
    %941 = vmatprep.subr.bf16.mxu0 0
    %942 = vmatpush2.bf16.msra.mxu0 0
    %943 = vmatprep.subr.bf16.mxu0 0
    %944 = vmatpush2.bf16.msra.mxu0 0
    %945 = vmatprep.subr.bf16.mxu0 0
    %946 = vmatpush2.bf16.msra.mxu0 0
    %947 = vmatprep.mubr.bf16.mxu0 0
    %948 = vmatmul.mubr.bf16.gmra.mxu0 %v285
    %v949 = vpop.f32.mrf.mxu0
    %v950 = vadd.f32 0.0, %v949
    %v951 = vpop.f32.mrf.mxu0
    %v952 = vpop.f32.mrf.mxu0
    %v953 = vadd.f32 0.0, %v952
    %v954 = vpop.f32.mrf.mxu0
    %955 = vmatprep.mubr.bf16.mxu0 0
    %956 = vmatmul.mubr.bf16.gmra.mxu0 %v288
    %v957 = vpop.f32.mrf.mxu0
    %v958 = vadd.f32 0.0, %v957
    %v959 = vpop.f32.mrf.mxu0
    %v960 = vpop.f32.mrf.mxu0
    %v961 = vadd.f32 0.0, %v960
    %v962 = vpop.f32.mrf.mxu0
    %963 = vmatprep.mubr.bf16.mxu0 0
    %964 = vmatmul.mubr.bf16.gmra.mxu0 %v291
    %v965 = vpop.f32.mrf.mxu0
    %v966 = vadd.f32 0.0, %v965
    %v967 = vpop.f32.mrf.mxu0
    %v968 = vpop.f32.mrf.mxu0
    %v969 = vadd.f32 0.0, %v968
    %v970 = vpop.f32.mrf.mxu0
    %971 = vmatprep.mubr.bf16.mxu0 0
    %972 = vmatmul.mubr.bf16.gmra.mxu0 %v294
    %v973 = vpop.f32.mrf.mxu0
    %v974 = vadd.f32 0.0, %v973
    %v975 = vpop.f32.mrf.mxu0
    %v976 = vpop.f32.mrf.mxu0
    %v977 = vadd.f32 0.0, %v976
    %v978 = vpop.f32.mrf.mxu0
    %979 = vdwg.mxu0
    %980 = vmatprep.subr.bf16.mxu0 0
    %981 = vmatpush1.bf16.msra.mxu0 0
    %982 = vmatprep.subr.bf16.mxu0 0
    %983 = vmatpush1.bf16.msra.mxu0 0
    %984 = vmatprep.subr.bf16.mxu0 0
    %985 = vmatpush1.bf16.msra.mxu0 0
    %986 = vmatprep.subr.bf16.mxu0 0
    %987 = vmatpush1.bf16.msra.mxu0 0
    %988 = vmatprep.subr.bf16.mxu0 0
    %989 = vmatpush1.bf16.msra.mxu0 %v912
    %990 = vmatprep.subr.bf16.mxu0 0
    %991 = vmatpush1.bf16.msra.mxu0 %v909
    %992 = vmatprep.subr.bf16.mxu0 0
    %993 = vmatpush1.bf16.msra.mxu0 %v906
    %994 = vmatprep.subr.bf16.mxu0 0
    %995 = vmatpush1.bf16.msra.mxu0 %v903
    %996 = vmatprep.subr.bf16.mxu0 0
    %997 = vmatpush2.bf16.msra.mxu0 0
    %998 = vmatprep.subr.bf16.mxu0 0
    %999 = vmatpush2.bf16.msra.mxu0 0
    %1000 = vmatprep.subr.bf16.mxu0 0
    %1001 = vmatpush2.bf16.msra.mxu0 0
    %1002 = vmatprep.subr.bf16.mxu0 0
    %1003 = vmatpush2.bf16.msra.mxu0 0
    %1004 = vmatprep.subr.bf16.mxu0 0
    %1005 = vmatpush2.bf16.msra.mxu0 0
    %1006 = vmatprep.subr.bf16.mxu0 0
    %1007 = vmatpush2.bf16.msra.mxu0 0
    %1008 = vmatprep.subr.bf16.mxu0 0
    %1009 = vmatpush2.bf16.msra.mxu0 0
    %1010 = vmatprep.subr.bf16.mxu0 0
    %1011 = vmatpush2.bf16.msra.mxu0 0
    %1012 = vmatprep.mubr.bf16.mxu0 0
    %1013 = vmatmul.mubr.bf16.gmra.mxu0 %v362
    %v1014 = vpop.f32.mrf.mxu0
    %v1015 = vadd.f32 %v950, %v1014
    %v1016 = vpop.f32.mrf.mxu0
    %v1017 = vpop.f32.mrf.mxu0
    %v1018 = vadd.f32 %v953, %v1017
    %v1019 = vpop.f32.mrf.mxu0
    %1020 = vmatprep.mubr.bf16.mxu0 0
    %1021 = vmatmul.mubr.bf16.gmra.mxu0 %v365
    %v1022 = vpop.f32.mrf.mxu0
    %v1023 = vadd.f32 %v958, %v1022
    %v1024 = vpop.f32.mrf.mxu0
    %v1025 = vpop.f32.mrf.mxu0
    %v1026 = vadd.f32 %v961, %v1025
    %v1027 = vpop.f32.mrf.mxu0
    %1028 = vmatprep.mubr.bf16.mxu0 0
    %1029 = vmatmul.mubr.bf16.gmra.mxu0 %v368
    %v1030 = vpop.f32.mrf.mxu0
    %v1031 = vadd.f32 %v966, %v1030
    %v1032 = vpop.f32.mrf.mxu0
    %v1033 = vpop.f32.mrf.mxu0
    %v1034 = vadd.f32 %v969, %v1033
    %v1035 = vpop.f32.mrf.mxu0
    %1036 = vmatprep.mubr.bf16.mxu0 0
    %1037 = vmatmul.mubr.bf16.gmra.mxu0 %v371
    %v1038 = vpop.f32.mrf.mxu0
    %v1039 = vadd.f32 %v974, %v1038
    %v1040 = vpop.f32.mrf.mxu0
    %v1041 = vpop.f32.mrf.mxu0
    %v1042 = vadd.f32 %v977, %v1041
    %v1043 = vpop.f32.mrf.mxu0
    %1044 = vdwg.mxu0
    %1045 = vmatprep.subr.bf16.mxu0 0
    %1046 = vmatpush1.bf16.msra.mxu0 0
    %1047 = vmatprep.subr.bf16.mxu0 0
    %1048 = vmatpush1.bf16.msra.mxu0 0
    %1049 = vmatprep.subr.bf16.mxu0 0
    %1050 = vmatpush1.bf16.msra.mxu0 0
    %1051 = vmatprep.subr.bf16.mxu0 0
    %1052 = vmatpush1.bf16.msra.mxu0 0
    %1053 = vmatprep.subr.bf16.mxu0 0
    %1054 = vmatpush1.bf16.msra.mxu0 %v914
    %1055 = vmatprep.subr.bf16.mxu0 0
    %1056 = vmatpush1.bf16.msra.mxu0 %v911
    %1057 = vmatprep.subr.bf16.mxu0 0
    %1058 = vmatpush1.bf16.msra.mxu0 %v908
    %1059 = vmatprep.subr.bf16.mxu0 0
    %1060 = vmatpush1.bf16.msra.mxu0 %v905
    %1061 = vmatprep.subr.bf16.mxu0 0
    %1062 = vmatpush2.bf16.msra.mxu0 0
    %1063 = vmatprep.subr.bf16.mxu0 0
    %1064 = vmatpush2.bf16.msra.mxu0 0
    %1065 = vmatprep.subr.bf16.mxu0 0
    %1066 = vmatpush2.bf16.msra.mxu0 0
    %1067 = vmatprep.subr.bf16.mxu0 0
    %1068 = vmatpush2.bf16.msra.mxu0 0
    %1069 = vmatprep.subr.bf16.mxu0 0
    %1070 = vmatpush2.bf16.msra.mxu0 0
    %1071 = vmatprep.subr.bf16.mxu0 0
    %1072 = vmatpush2.bf16.msra.mxu0 0
    %1073 = vmatprep.subr.bf16.mxu0 0
    %1074 = vmatpush2.bf16.msra.mxu0 0
    %1075 = vmatprep.subr.bf16.mxu0 0
    %1076 = vmatpush2.bf16.msra.mxu0 0
    %1077 = vmatprep.mubr.bf16.mxu0 0
    %1078 = vmatmul.mubr.bf16.gmra.mxu0 %v452
    %v1079 = vpop.f32.mrf.mxu0
    %v1080 = vadd.f32 0.0, %v1079
    %v1081 = vpop.f32.mrf.mxu0
    %v1082 = vpop.f32.mrf.mxu0
    %v1083 = vadd.f32 0.0, %v1082
    %v1084 = vpop.f32.mrf.mxu0
    %1085 = vmatprep.mubr.bf16.mxu0 0
    %1086 = vmatmul.mubr.bf16.gmra.mxu0 %v455
    %v1087 = vpop.f32.mrf.mxu0
    %v1088 = vadd.f32 0.0, %v1087
    %v1089 = vpop.f32.mrf.mxu0
    %v1090 = vpop.f32.mrf.mxu0
    %v1091 = vadd.f32 0.0, %v1090
    %v1092 = vpop.f32.mrf.mxu0
    %1093 = vmatprep.mubr.bf16.mxu0 0
    %1094 = vmatmul.mubr.bf16.gmra.mxu0 %v458
    %v1095 = vpop.f32.mrf.mxu0
    %v1096 = vadd.f32 0.0, %v1095
    %v1097 = vpop.f32.mrf.mxu0
    %v1098 = vpop.f32.mrf.mxu0
    %v1099 = vadd.f32 0.0, %v1098
    %v1100 = vpop.f32.mrf.mxu0
    %1101 = vmatprep.mubr.bf16.mxu0 0
    %1102 = vmatmul.mubr.bf16.gmra.mxu0 %v461
    %v1103 = vpop.f32.mrf.mxu0
    %v1104 = vadd.f32 0.0, %v1103
    %v1105 = vpop.f32.mrf.mxu0
    %v1106 = vpop.f32.mrf.mxu0
    %v1107 = vadd.f32 0.0, %v1106
    %v1108 = vpop.f32.mrf.mxu0
    %1109 = vdwg.mxu0
    %v1110 = vadd.f32 %v1015, %v1080
    %v1111 = vadd.f32 %v1018, %v1083
    %v1112 = vadd.f32 %v1023, %v1088
    %v1113 = vadd.f32 %v1026, %v1091
    %v1114 = vadd.f32 %v1031, %v1096
    %v1115 = vadd.f32 %v1034, %v1099
    %v1116 = vadd.f32 %v1039, %v1104
    %v1117 = vadd.f32 %v1042, %v1107
    %v1118 = vmax.f32 %v1110, 0.0
    %v1119 = vmax.f32 %v1111, 0.0
    %v1120 = vmax.f32 %v1112, 0.0
    %v1121 = vmax.f32 %v1113, 0.0
    %v1122 = vmax.f32 %v1114, 0.0
    %v1123 = vmax.f32 %v1115, 0.0
    %v1124 = vmax.f32 %v1116, 0.0
    %v1125 = vmax.f32 %v1117, 0.0
    %v1126 = vadd.f32 %v1118, %v1119
    %v1127 = vadd.f32 %v1126, %v1120
    %v1128 = vadd.f32 %v1127, %v1121
    %v1129 = vadd.f32 %v1128, %v1122
    %v1130 = vadd.f32 %v1129, %v1123
    %v1131 = vadd.f32 %v1130, %v1124
    %v1132 = vadd.f32 %v1131, %v1125
    %v1133 = vrot.slane %v1132, 4
    %v1134 = vadd.f32 %v1132, %v1133
    %v1135 = vrot.slane %v1134, 2
    %v1136 = vadd.f32 %v1134, %v1135
    %v1137 = vrot.slane %v1136, 1
    %v1138 = vadd.f32 %v1136, %v1137
    %v1139 = vmul.f32 %v1118, %v1118
    %v1140 = vmul.f32 %v1119, %v1119
    %v1141 = vmul.f32 %v1120, %v1120
    %v1142 = vmul.f32 %v1121, %v1121
    %v1143 = vmul.f32 %v1122, %v1122
    %v1144 = vmul.f32 %v1123, %v1123
    %v1145 = vmul.f32 %v1124, %v1124
    %v1146 = vmul.f32 %v1125, %v1125
    %v1147 = vadd.f32 %v1139, %v1140
    %v1148 = vadd.f32 %v1147, %v1141
    %v1149 = vadd.f32 %v1148, %v1142
    %v1150 = vadd.f32 %v1149, %v1143
    %v1151 = vadd.f32 %v1150, %v1144
    %v1152 = vadd.f32 %v1151, %v1145
    %v1153 = vadd.f32 %v1152, %v1146
    %v1154 = vrot.slane %v1153, 4
    %v1155 = vadd.f32 %v1153, %v1154
    %v1156 = vrot.slane %v1155, 2
    %v1157 = vadd.f32 %v1155, %v1156
    %v1158 = vrot.slane %v1157, 1
    %v1159 = vadd.f32 %v1157, %v1158
    %v1160 = vmul.f32 %v1138, 0.015625
    %v1161 = vmul.f32 %v1159, 0.015625
    %v1162 = vmul.f32 %v1160, %v1160
    %v1163 = vsub.f32 %v1161, %v1162
    %v1164 = vmax.f32 %v1163, 0.0
    %v1165 = vsub.f32 %v1118, %v1160
    %v1166 = vsub.f32 %v1119, %v1160
    %v1167 = vsub.f32 %v1120, %v1160
    %v1168 = vsub.f32 %v1121, %v1160
    %v1169 = vsub.f32 %v1122, %v1160
    %v1170 = vsub.f32 %v1123, %v1160
    %v1171 = vsub.f32 %v1124, %v1160
    %v1172 = vsub.f32 %v1125, %v1160
    %v1173 = vadd.f32 %v1164, 1e-05
    %v1174 = vrsqrt.pop %v1173
    %v1175 = vmul.f32 %v1165, %v1174
    %v1176 = vmul.f32 %v1166, %v1174
    %v1177 = vmul.f32 %v1167, %v1174
    %v1178 = vmul.f32 %v1168, %v1174
    %v1179 = vmul.f32 %v1169, %v1174
    %v1180 = vmul.f32 %v1170, %v1174
    %v1181 = vmul.f32 %v1171, %v1174
    %v1182 = vmul.f32 %v1172, %v1174
    %v1183 = vpack.c.bf16 %v1176, %v1175
    %v1184 = vpack.c.bf16 %v1178, %v1177
    %v1185 = vpack.c.bf16 %v1180, %v1179
    %v1186 = vpack.c.bf16 %v1182, %v1181
    %v1187 = vld [vmem:[#allocation7] sm:$0xff]
    %v1188 = vld [vmem:[#allocation7 + $0x8] sm:$0xf]
    %v1189 = vld [vmem:[#allocation7 + $0xc] sm:$0xff]
    %v1190 = vld [vmem:[#allocation7 + $0x14] sm:$0xf]
    %v1191 = vld [vmem:[#allocation7 + $0x18] sm:$0xff]
    %v1192 = vld [vmem:[#allocation7 + $0x20] sm:$0xf]
    %v1193 = vld [vmem:[#allocation7 + $0x24] sm:$0xff]
    %v1194 = vld [vmem:[#allocation7 + $0x2c] sm:$0xf]
    %v1195 = vld [vmem:[#allocation7 + $0x30] sm:$0xff]
    %v1196 = vld [vmem:[#allocation7 + $0x38] sm:$0xf]
    %v1197 = vld [vmem:[#allocation7 + $0x3c] sm:$0xff]
    %v1198 = vld [vmem:[#allocation7 + $0x44] sm:$0xf]
    %v1199 = vld [vmem:[#allocation7 + $0x48] sm:$0xff]
    %v1200 = vld [vmem:[#allocation7 + $0x50] sm:$0xf]
    %v1201 = vld [vmem:[#allocation7 + $0x54] sm:$0xff]
    %v1202 = vld [vmem:[#allocation7 + $0x5c] sm:$0xf]
    %v1203 = vld [vmem:[#allocation7 + $0x60] sm:$0xff]
    %v1204 = vld [vmem:[#allocation7 + $0x68] sm:$0xf]
    %v1205 = vld [vmem:[#allocation7 + $0x6c] sm:$0xff]
    %v1206 = vld [vmem:[#allocation7 + $0x74] sm:$0xf]
    %v1207 = vld [vmem:[#allocation7 + $0x78] sm:$0xff]
    %v1208 = vld [vmem:[#allocation7 + $0x80] sm:$0xf]
    %v1209 = vld [vmem:[#allocation7 + $0x84] sm:$0xff]
    %v1210 = vld [vmem:[#allocation7 + $0x8c] sm:$0xf]
    %v1211 = vld [vmem:[#allocation7 + $0x90] sm:$0xff]
    %v1212 = vld [vmem:[#allocation7 + $0x98] sm:$0xf]
    %v1213 = vld [vmem:[#allocation7 + $0x9c] sm:$0xff]
    %v1214 = vld [vmem:[#allocation7 + $0xa4] sm:$0xf]
    %v1215 = vld [vmem:[#allocation7 + $0xa8] sm:$0xff]
    %v1216 = vld [vmem:[#allocation7 + $0xb0] sm:$0xf]
    %v1217 = vld [vmem:[#allocation7 + $0xb4] sm:$0xff]
    %v1218 = vld [vmem:[#allocation7 + $0xbc] sm:$0xf]
    %v1251 = vunpack.c.l.b16 %v1187
    %v1252 = vunpack.c.h.b16 %v1187
    %v1253 = vunpack.c.l.b16 %v1188
    %v1254 = vunpack.c.l.b16 %v1189
    %v1255 = vunpack.c.h.b16 %v1189
    %v1256 = vunpack.c.l.b16 %v1190
    %v1257 = vunpack.c.l.b16 %v1191
    %v1258 = vunpack.c.h.b16 %v1191
    %v1259 = vunpack.c.l.b16 %v1192
    %v1260 = vunpack.c.l.b16 %v1193
    %v1261 = vunpack.c.h.b16 %v1193
    %v1262 = vunpack.c.l.b16 %v1194
    %v1263 = vunpack.c.l.b16 %v1195
    %v1264 = vunpack.c.h.b16 %v1195
    %v1265 = vunpack.c.l.b16 %v1196
    %v1266 = vunpack.c.l.b16 %v1197
    %v1267 = vunpack.c.h.b16 %v1197
    %v1268 = vunpack.c.l.b16 %v1198
    %v1269 = vunpack.c.l.b16 %v1199
    %v1270 = vunpack.c.h.b16 %v1199
    %v1271 = vunpack.c.l.b16 %v1200
    %v1272 = vunpack.c.l.b16 %v1201
    %v1273 = vunpack.c.h.b16 %v1201
    %v1274 = vunpack.c.l.b16 %v1202
    %v1275 = vunpack.c.l.b16 %v1203
    %v1276 = vunpack.c.h.b16 %v1203
    %v1277 = vunpack.c.l.b16 %v1204
    %v1278 = vunpack.c.l.b16 %v1205
    %v1279 = vunpack.c.h.b16 %v1205
    %v1280 = vunpack.c.l.b16 %v1206
    %v1281 = vunpack.c.l.b16 %v1207
    %v1282 = vunpack.c.h.b16 %v1207
    %v1283 = vunpack.c.l.b16 %v1208
    %v1284 = vunpack.c.l.b16 %v1209
    %v1285 = vunpack.c.h.b16 %v1209
    %v1286 = vunpack.c.l.b16 %v1210
    %v1287 = vunpack.c.l.b16 %v1211
    %v1288 = vunpack.c.h.b16 %v1211
    %v1289 = vunpack.c.l.b16 %v1212
    %v1290 = vunpack.c.l.b16 %v1213
    %v1291 = vunpack.c.h.b16 %v1213
    %v1292 = vunpack.c.l.b16 %v1214
    %v1293 = vunpack.c.l.b16 %v1215
    %v1294 = vunpack.c.h.b16 %v1215
    %v1295 = vunpack.c.l.b16 %v1216
    %v1296 = vunpack.c.l.b16 %v1217
    %v1297 = vunpack.c.h.b16 %v1217
    %v1298 = vunpack.c.l.b16 %v1218
    %v1299 = vpack.c.b16 %v1254, %v1251
    %v1300 = vpack.c.b16 %v1255, %v1252
    %v1301 = vpack.c.b16 %v1256, %v1253
    %v1302 = vpack.c.b16 %v1260, %v1257
    %v1303 = vpack.c.b16 %v1261, %v1258
    %v1304 = vpack.c.b16 %v1262, %v1259
    %v1305 = vpack.c.b16 %v1266, %v1263
    %v1306 = vpack.c.b16 %v1267, %v1264
    %v1307 = vpack.c.b16 %v1268, %v1265
    %v1308 = vpack.c.b16 %v1272, %v1269
    %v1309 = vpack.c.b16 %v1273, %v1270
    %v1310 = vpack.c.b16 %v1274, %v1271
    %v1311 = vpack.c.b16 %v1278, %v1275
    %v1312 = vpack.c.b16 %v1279, %v1276
    %v1313 = vpack.c.b16 %v1280, %v1277
    %v1314 = vpack.c.b16 %v1284, %v1281
    %v1315 = vpack.c.b16 %v1285, %v1282
    %v1316 = vpack.c.b16 %v1286, %v1283
    %v1317 = vpack.c.b16 %v1290, %v1287
    %v1318 = vpack.c.b16 %v1291, %v1288
    %v1319 = vpack.c.b16 %v1292, %v1289
    %v1320 = vpack.c.b16 %v1296, %v1293
    %v1321 = vpack.c.b16 %v1297, %v1294
    %v1322 = vpack.c.b16 %v1298, %v1295
    %1347 = vmatprep.subr.bf16.mxu0 %v1321
    %1348 = vmatpush1.bf16.msra.mxu0 %v1320
    %1349 = vmatprep.subr.bf16.mxu0 %v1318
    %1350 = vmatpush1.bf16.msra.mxu0 %v1317
    %1351 = vmatprep.subr.bf16.mxu0 %v1315
    %1352 = vmatpush1.bf16.msra.mxu0 %v1314
    %1353 = vmatprep.subr.bf16.mxu0 %v1312
    %1354 = vmatpush1.bf16.msra.mxu0 %v1311
    %1355 = vmatprep.subr.bf16.mxu0 %v1309
    %1356 = vmatpush1.bf16.msra.mxu0 %v1308
    %1357 = vmatprep.subr.bf16.mxu0 %v1306
    %1358 = vmatpush1.bf16.msra.mxu0 %v1305
    %1359 = vmatprep.subr.bf16.mxu0 %v1303
    %1360 = vmatpush1.bf16.msra.mxu0 %v1302
    %1361 = vmatprep.subr.bf16.mxu0 %v1300
    %1362 = vmatpush1.bf16.msra.mxu0 %v1299
    %1363 = vmatprep.subr.bf16.mxu0 0
    %1364 = vmatpush2.bf16.msra.mxu0 0
    %1365 = vmatprep.subr.bf16.mxu0 0
    %1366 = vmatpush2.bf16.msra.mxu0 0
    %1367 = vmatprep.subr.bf16.mxu0 0
    %1368 = vmatpush2.bf16.msra.mxu0 0
    %1369 = vmatprep.subr.bf16.mxu0 0
    %1370 = vmatpush2.bf16.msra.mxu0 0
    %1371 = vmatprep.subr.bf16.mxu0 0
    %1372 = vmatpush2.bf16.msra.mxu0 0
    %1373 = vmatprep.subr.bf16.mxu0 0
    %1374 = vmatpush2.bf16.msra.mxu0 0
    %1375 = vmatprep.subr.bf16.mxu0 0
    %1376 = vmatpush2.bf16.msra.mxu0 0
    %1377 = vmatprep.subr.bf16.mxu0 0
    %1378 = vmatpush2.bf16.msra.mxu0 0
    %1379 = vmatprep.mubr.bf16.mxu0 0
    %1380 = vmatmul.mubr.bf16.gmra.mxu0 %v1183
    %v1381 = vpop.f32.mrf.mxu0
    %v1382 = vadd.f32 0.0, %v1381
    %v1383 = vpop.f32.mrf.mxu0
    %v1384 = vadd.f32 0.0, %v1383
    %v1385 = vpop.f32.mrf.mxu0
    %v1386 = vadd.f32 0.0, %v1385
    %v1387 = vpop.f32.mrf.mxu0
    %v1388 = vadd.f32 0.0, %v1387
    %1389 = vmatprep.mubr.bf16.mxu0 0
    %1390 = vmatmul.mubr.bf16.gmra.mxu0 %v1184
    %v1391 = vpop.f32.mrf.mxu0
    %v1392 = vadd.f32 0.0, %v1391
    %v1393 = vpop.f32.mrf.mxu0
    %v1394 = vadd.f32 0.0, %v1393
    %v1395 = vpop.f32.mrf.mxu0
    %v1396 = vadd.f32 0.0, %v1395
    %v1397 = vpop.f32.mrf.mxu0
    %v1398 = vadd.f32 0.0, %v1397
    %1399 = vmatprep.mubr.bf16.mxu0 0
    %1400 = vmatmul.mubr.bf16.gmra.mxu0 %v1185
    %v1401 = vpop.f32.mrf.mxu0
    %v1402 = vadd.f32 0.0, %v1401
    %v1403 = vpop.f32.mrf.mxu0
    %v1404 = vadd.f32 0.0, %v1403
    %v1405 = vpop.f32.mrf.mxu0
    %v1406 = vadd.f32 0.0, %v1405
    %v1407 = vpop.f32.mrf.mxu0
    %v1408 = vadd.f32 0.0, %v1407
    %1409 = vmatprep.mubr.bf16.mxu0 0
    %1410 = vmatmul.mubr.bf16.gmra.mxu0 %v1186
    %v1411 = vpop.f32.mrf.mxu0
    %v1412 = vadd.f32 0.0, %v1411
    %v1413 = vpop.f32.mrf.mxu0
    %v1414 = vadd.f32 0.0, %v1413
    %v1415 = vpop.f32.mrf.mxu0
    %v1416 = vadd.f32 0.0, %v1415
    %v1417 = vpop.f32.mrf.mxu0
    %v1418 = vadd.f32 0.0, %v1417
    %1419 = vdwg.mxu0
    %1420 = vmatprep.subr.bf16.mxu0 0
    %1421 = vmatpush1.bf16.msra.mxu0 %v1322
    %1422 = vmatprep.subr.bf16.mxu0 0
    %1423 = vmatpush1.bf16.msra.mxu0 %v1319
    %1424 = vmatprep.subr.bf16.mxu0 0
    %1425 = vmatpush1.bf16.msra.mxu0 %v1316
    %1426 = vmatprep.subr.bf16.mxu0 0
    %1427 = vmatpush1.bf16.msra.mxu0 %v1313
    %1428 = vmatprep.subr.bf16.mxu0 0
    %1429 = vmatpush1.bf16.msra.mxu0 %v1310
    %1430 = vmatprep.subr.bf16.mxu0 0
    %1431 = vmatpush1.bf16.msra.mxu0 %v1307
    %1432 = vmatprep.subr.bf16.mxu0 0
    %1433 = vmatpush1.bf16.msra.mxu0 %v1304
    %1434 = vmatprep.subr.bf16.mxu0 0
    %1435 = vmatpush1.bf16.msra.mxu0 %v1301
    %1436 = vmatprep.subr.bf16.mxu0 0
    %1437 = vmatpush2.bf16.msra.mxu0 0
    %1438 = vmatprep.subr.bf16.mxu0 0
    %1439 = vmatpush2.bf16.msra.mxu0 0
    %1440 = vmatprep.subr.bf16.mxu0 0
    %1441 = vmatpush2.bf16.msra.mxu0 0
    %1442 = vmatprep.subr.bf16.mxu0 0
    %1443 = vmatpush2.bf16.msra.mxu0 0
    %1444 = vmatprep.subr.bf16.mxu0 0
    %1445 = vmatpush2.bf16.msra.mxu0 0
    %1446 = vmatprep.subr.bf16.mxu0 0
    %1447 = vmatpush2.bf16.msra.mxu0 0
    %1448 = vmatprep.subr.bf16.mxu0 0
    %1449 = vmatpush2.bf16.msra.mxu0 0
    %1450 = vmatprep.subr.bf16.mxu0 0
    %1451 = vmatpush2.bf16.msra.mxu0 0
    %1452 = vmatprep.mubr.bf16.mxu0 0
    %1453 = vmatmul.mubr.bf16.gmra.mxu0 %v1183
    %v1454 = vpop.f32.mrf.mxu0
    %v1455 = vadd.f32 0.0, %v1454
    %v1456 = vpop.f32.mrf.mxu0
    %v1457 = vpop.f32.mrf.mxu0
    %v1458 = vadd.f32 0.0, %v1457
    %v1459 = vpop.f32.mrf.mxu0
    %1460 = vmatprep.mubr.bf16.mxu0 0
    %1461 = vmatmul.mubr.bf16.gmra.mxu0 %v1184
    %v1462 = vpop.f32.mrf.mxu0
    %v1463 = vadd.f32 0.0, %v1462
    %v1464 = vpop.f32.mrf.mxu0
    %v1465 = vpop.f32.mrf.mxu0
    %v1466 = vadd.f32 0.0, %v1465
    %v1467 = vpop.f32.mrf.mxu0
    %1468 = vmatprep.mubr.bf16.mxu0 0
    %1469 = vmatmul.mubr.bf16.gmra.mxu0 %v1185
    %v1470 = vpop.f32.mrf.mxu0
    %v1471 = vadd.f32 0.0, %v1470
    %v1472 = vpop.f32.mrf.mxu0
    %v1473 = vpop.f32.mrf.mxu0
    %v1474 = vadd.f32 0.0, %v1473
    %v1475 = vpop.f32.mrf.mxu0
    %1476 = vmatprep.mubr.bf16.mxu0 0
    %1477 = vmatmul.mubr.bf16.gmra.mxu0 %v1186
    %v1478 = vpop.f32.mrf.mxu0
    %v1479 = vadd.f32 0.0, %v1478
    %v1480 = vpop.f32.mrf.mxu0
    %v1481 = vpop.f32.mrf.mxu0
    %v1482 = vadd.f32 0.0, %v1481
    %v1483 = vpop.f32.mrf.mxu0
    %1484 = vdwg.mxu0
    %v1485 = vpack.c.bf16 %v1386, %v1382
    %v1486 = vpack.c.bf16 %v1388, %v1384
    %v1487 = vpack.c.bf16 %v1458, %v1455
    %v1488 = vpack.c.bf16 %v1396, %v1392
    %v1489 = vpack.c.bf16 %v1398, %v1394
    %v1490 = vpack.c.bf16 %v1466, %v1463
    %v1491 = vpack.c.bf16 %v1406, %v1402
    %v1492 = vpack.c.bf16 %v1408, %v1404
    %v1493 = vpack.c.bf16 %v1474, %v1471
    %v1494 = vpack.c.bf16 %v1416, %v1412
    %v1495 = vpack.c.bf16 %v1418, %v1414
    %v1496 = vpack.c.bf16 %v1482, %v1479
    %1497 = vmatprep.subr.bf16.mxu0 0
    %1498 = vmatpush1.bf16.msra.mxu0 0
    %1499 = vmatprep.subr.bf16.mxu0 0
    %1500 = vmatpush1.bf16.msra.mxu0 0
    %1501 = vmatprep.subr.bf16.mxu0 0
    %1502 = vmatpush1.bf16.msra.mxu0 0
    %1503 = vmatprep.subr.bf16.mxu0 0
    %1504 = vmatpush1.bf16.msra.mxu0 0
    %1505 = vmatprep.subr.bf16.mxu0 0
    %1506 = vmatpush1.bf16.msra.mxu0 %v1495
    %1507 = vmatprep.subr.bf16.mxu0 0
    %1508 = vmatpush1.bf16.msra.mxu0 %v1492
    %1509 = vmatprep.subr.bf16.mxu0 0
    %1510 = vmatpush1.bf16.msra.mxu0 %v1489
    %1511 = vmatprep.subr.bf16.mxu0 0
    %1512 = vmatpush1.bf16.msra.mxu0 %v1486
    %1513 = vmatprep.subr.bf16.mxu0 0
    %1514 = vmatpush2.bf16.msra.mxu0 0
    %1515 = vmatprep.subr.bf16.mxu0 0
    %1516 = vmatpush2.bf16.msra.mxu0 0
    %1517 = vmatprep.subr.bf16.mxu0 0
    %1518 = vmatpush2.bf16.msra.mxu0 0
    %1519 = vmatprep.subr.bf16.mxu0 0
    %1520 = vmatpush2.bf16.msra.mxu0 0
    %1521 = vmatprep.subr.bf16.mxu0 0
    %1522 = vmatpush2.bf16.msra.mxu0 0
    %1523 = vmatprep.subr.bf16.mxu0 0
    %1524 = vmatpush2.bf16.msra.mxu0 0
    %1525 = vmatprep.subr.bf16.mxu0 0
    %1526 = vmatpush2.bf16.msra.mxu0 0
    %1527 = vmatprep.subr.bf16.mxu0 0
    %1528 = vmatpush2.bf16.msra.mxu0 0
    %1529 = vmatprep.mubr.bf16.mxu0 0
    %1530 = vmatmul.mubr.bf16.gmra.mxu0 %v285
    %v1531 = vpop.f32.mrf.mxu0
    %v1532 = vadd.f32 0.0, %v1531
    %v1533 = vpop.f32.mrf.mxu0
    %v1534 = vpop.f32.mrf.mxu0
    %v1535 = vadd.f32 0.0, %v1534
    %v1536 = vpop.f32.mrf.mxu0
    %1537 = vmatprep.mubr.bf16.mxu0 0
    %1538 = vmatmul.mubr.bf16.gmra.mxu0 %v288
    %v1539 = vpop.f32.mrf.mxu0
    %v1540 = vadd.f32 0.0, %v1539
    %v1541 = vpop.f32.mrf.mxu0
    %v1542 = vpop.f32.mrf.mxu0
    %v1543 = vadd.f32 0.0, %v1542
    %v1544 = vpop.f32.mrf.mxu0
    %1545 = vmatprep.mubr.bf16.mxu0 0
    %1546 = vmatmul.mubr.bf16.gmra.mxu0 %v291
    %v1547 = vpop.f32.mrf.mxu0
    %v1548 = vadd.f32 0.0, %v1547
    %v1549 = vpop.f32.mrf.mxu0
    %v1550 = vpop.f32.mrf.mxu0
    %v1551 = vadd.f32 0.0, %v1550
    %v1552 = vpop.f32.mrf.mxu0
    %1553 = vmatprep.mubr.bf16.mxu0 0
    %1554 = vmatmul.mubr.bf16.gmra.mxu0 %v294
    %v1555 = vpop.f32.mrf.mxu0
    %v1556 = vadd.f32 0.0, %v1555
    %v1557 = vpop.f32.mrf.mxu0
    %v1558 = vpop.f32.mrf.mxu0
    %v1559 = vadd.f32 0.0, %v1558
    %v1560 = vpop.f32.mrf.mxu0
    %1561 = vdwg.mxu0
    %1562 = vmatprep.subr.bf16.mxu0 0
    %1563 = vmatpush1.bf16.msra.mxu0 0
    %1564 = vmatprep.subr.bf16.mxu0 0
    %1565 = vmatpush1.bf16.msra.mxu0 0
    %1566 = vmatprep.subr.bf16.mxu0 0
    %1567 = vmatpush1.bf16.msra.mxu0 0
    %1568 = vmatprep.subr.bf16.mxu0 0
    %1569 = vmatpush1.bf16.msra.mxu0 0
    %1570 = vmatprep.subr.bf16.mxu0 0
    %1571 = vmatpush1.bf16.msra.mxu0 %v1494
    %1572 = vmatprep.subr.bf16.mxu0 0
    %1573 = vmatpush1.bf16.msra.mxu0 %v1491
    %1574 = vmatprep.subr.bf16.mxu0 0
    %1575 = vmatpush1.bf16.msra.mxu0 %v1488
    %1576 = vmatprep.subr.bf16.mxu0 0
    %1577 = vmatpush1.bf16.msra.mxu0 %v1485
    %1578 = vmatprep.subr.bf16.mxu0 0
    %1579 = vmatpush2.bf16.msra.mxu0 0
    %1580 = vmatprep.subr.bf16.mxu0 0
    %1581 = vmatpush2.bf16.msra.mxu0 0
    %1582 = vmatprep.subr.bf16.mxu0 0
    %1583 = vmatpush2.bf16.msra.mxu0 0
    %1584 = vmatprep.subr.bf16.mxu0 0
    %1585 = vmatpush2.bf16.msra.mxu0 0
    %1586 = vmatprep.subr.bf16.mxu0 0
    %1587 = vmatpush2.bf16.msra.mxu0 0
    %1588 = vmatprep.subr.bf16.mxu0 0
    %1589 = vmatpush2.bf16.msra.mxu0 0
    %1590 = vmatprep.subr.bf16.mxu0 0
    %1591 = vmatpush2.bf16.msra.mxu0 0
    %1592 = vmatprep.subr.bf16.mxu0 0
    %1593 = vmatpush2.bf16.msra.mxu0 0
    %1594 = vmatprep.mubr.bf16.mxu0 0
    %1595 = vmatmul.mubr.bf16.gmra.mxu0 %v362
    %v1596 = vpop.f32.mrf.mxu0
    %v1597 = vadd.f32 %v1532, %v1596
    %v1598 = vpop.f32.mrf.mxu0
    %v1599 = vpop.f32.mrf.mxu0
    %v1600 = vadd.f32 %v1535, %v1599
    %v1601 = vpop.f32.mrf.mxu0
    %1602 = vmatprep.mubr.bf16.mxu0 0
    %1603 = vmatmul.mubr.bf16.gmra.mxu0 %v365
    %v1604 = vpop.f32.mrf.mxu0
    %v1605 = vadd.f32 %v1540, %v1604
    %v1606 = vpop.f32.mrf.mxu0
    %v1607 = vpop.f32.mrf.mxu0
    %v1608 = vadd.f32 %v1543, %v1607
    %v1609 = vpop.f32.mrf.mxu0
    %1610 = vmatprep.mubr.bf16.mxu0 0
    %1611 = vmatmul.mubr.bf16.gmra.mxu0 %v368
    %v1612 = vpop.f32.mrf.mxu0
    %v1613 = vadd.f32 %v1548, %v1612
    %v1614 = vpop.f32.mrf.mxu0
    %v1615 = vpop.f32.mrf.mxu0
    %v1616 = vadd.f32 %v1551, %v1615
    %v1617 = vpop.f32.mrf.mxu0
    %1618 = vmatprep.mubr.bf16.mxu0 0
    %1619 = vmatmul.mubr.bf16.gmra.mxu0 %v371
    %v1620 = vpop.f32.mrf.mxu0
    %v1621 = vadd.f32 %v1556, %v1620
    %v1622 = vpop.f32.mrf.mxu0
    %v1623 = vpop.f32.mrf.mxu0
    %v1624 = vadd.f32 %v1559, %v1623
    %v1625 = vpop.f32.mrf.mxu0
    %1626 = vdwg.mxu0
    %1627 = vmatprep.subr.bf16.mxu0 0
    %1628 = vmatpush1.bf16.msra.mxu0 0
    %1629 = vmatprep.subr.bf16.mxu0 0
    %1630 = vmatpush1.bf16.msra.mxu0 0
    %1631 = vmatprep.subr.bf16.mxu0 0
    %1632 = vmatpush1.bf16.msra.mxu0 0
    %1633 = vmatprep.subr.bf16.mxu0 0
    %1634 = vmatpush1.bf16.msra.mxu0 0
    %1635 = vmatprep.subr.bf16.mxu0 0
    %1636 = vmatpush1.bf16.msra.mxu0 %v1496
    %1637 = vmatprep.subr.bf16.mxu0 0
    %1638 = vmatpush1.bf16.msra.mxu0 %v1493
    %1639 = vmatprep.subr.bf16.mxu0 0
    %1640 = vmatpush1.bf16.msra.mxu0 %v1490
    %1641 = vmatprep.subr.bf16.mxu0 0
    %1642 = vmatpush1.bf16.msra.mxu0 %v1487
    %1643 = vmatprep.subr.bf16.mxu0 0
    %1644 = vmatpush2.bf16.msra.mxu0 0
    %1645 = vmatprep.subr.bf16.mxu0 0
    %1646 = vmatpush2.bf16.msra.mxu0 0
    %1647 = vmatprep.subr.bf16.mxu0 0
    %1648 = vmatpush2.bf16.msra.mxu0 0
    %1649 = vmatprep.subr.bf16.mxu0 0
    %1650 = vmatpush2.bf16.msra.mxu0 0
    %1651 = vmatprep.subr.bf16.mxu0 0
    %1652 = vmatpush2.bf16.msra.mxu0 0
    %1653 = vmatprep.subr.bf16.mxu0 0
    %1654 = vmatpush2.bf16.msra.mxu0 0
    %1655 = vmatprep.subr.bf16.mxu0 0
    %1656 = vmatpush2.bf16.msra.mxu0 0
    %1657 = vmatprep.subr.bf16.mxu0 0
    %1658 = vmatpush2.bf16.msra.mxu0 0
    %1659 = vmatprep.mubr.bf16.mxu0 0
    %1660 = vmatmul.mubr.bf16.gmra.mxu0 %v452
    %v1661 = vpop.f32.mrf.mxu0
    %v1662 = vadd.f32 0.0, %v1661
    %v1663 = vpop.f32.mrf.mxu0
    %v1664 = vpop.f32.mrf.mxu0
    %v1665 = vadd.f32 0.0, %v1664
    %v1666 = vpop.f32.mrf.mxu0
    %1667 = vmatprep.mubr.bf16.mxu0 0
    %1668 = vmatmul.mubr.bf16.gmra.mxu0 %v455
    %v1669 = vpop.f32.mrf.mxu0
    %v1670 = vadd.f32 0.0, %v1669
    %v1671 = vpop.f32.mrf.mxu0
    %v1672 = vpop.f32.mrf.mxu0
    %v1673 = vadd.f32 0.0, %v1672
    %v1674 = vpop.f32.mrf.mxu0
    %1675 = vmatprep.mubr.bf16.mxu0 0
    %1676 = vmatmul.mubr.bf16.gmra.mxu0 %v458
    %v1677 = vpop.f32.mrf.mxu0
    %v1678 = vadd.f32 0.0, %v1677
    %v1679 = vpop.f32.mrf.mxu0
    %v1680 = vpop.f32.mrf.mxu0
    %v1681 = vadd.f32 0.0, %v1680
    %v1682 = vpop.f32.mrf.mxu0
    %1683 = vmatprep.mubr.bf16.mxu0 0
    %1684 = vmatmul.mubr.bf16.gmra.mxu0 %v461
    %v1685 = vpop.f32.mrf.mxu0
    %v1686 = vadd.f32 0.0, %v1685
    %v1687 = vpop.f32.mrf.mxu0
    %v1688 = vpop.f32.mrf.mxu0
    %v1689 = vadd.f32 0.0, %v1688
    %v1690 = vpop.f32.mrf.mxu0
    %1691 = vdwg.mxu0
    %v1692 = vadd.f32 %v1597, %v1662
    %v1693 = vadd.f32 %v1600, %v1665
    %v1694 = vadd.f32 %v1605, %v1670
    %v1695 = vadd.f32 %v1608, %v1673
    %v1696 = vadd.f32 %v1613, %v1678
    %v1697 = vadd.f32 %v1616, %v1681
    %v1698 = vadd.f32 %v1621, %v1686
    %v1699 = vadd.f32 %v1624, %v1689
    %1700 = vst [vmem:[#allocation8] sm:$0xff] %v1692
    %1701 = vst [vmem:[#allocation8 + $0x8] sm:$0xff] %v1693
    %1702 = vst [vmem:[#allocation8 + $0x10] sm:$0xff] %v1694
    %1703 = vst [vmem:[#allocation8 + $0x18] sm:$0xff] %v1695
    %1704 = vst [vmem:[#allocation8 + $0x20] sm:$0xff] %v1696
    %1705 = vst [vmem:[#allocation8 + $0x28] sm:$0xff] %v1697
    %1706 = vst [vmem:[#allocation8 + $0x30] sm:$0xff] %v1698
    %1707 = vst [vmem:[#allocation8 + $0x38] sm:$0xff] %v1699
    // Predicated region
    $region34: #{tpu_custom_call.1} parent=1 // pred_check
      _
    $region35: #{tpu_custom_call.1} parent=1 // pred_check_branch
      %1709 = sbr.rel (0) target = $region37
    $region36: #{tpu_custom_call.1} parent=1 // pred_region
      %s1711 = ssub.s32 1024, 1024
      %1712 = vsyncadd [#allocation4], %s1711
      %s1713 = sshll.u32 [#allocation8], 4
      %s1714 = int_to_ptr.vmem [resolvable:$true] %s1713
      %1719 = dma.vmem_to_hbm [thread:$0]  %s1714, 1024, %s5, [#allocation4], 128, 128, 8
    $region37: #{tpu_custom_call.1} parent=1 // pred_fallthru
      _
    // Predicated region
    $region38: #{tpu_custom_call.1} parent=1 // pred_check
      _
    $region39: #{tpu_custom_call.1} parent=1 // pred_check_branch
      %1721 = sbr.rel (0) target = $region41
    $region40: #{tpu_custom_call.1} parent=1 // pred_region
      %1722 = dma.done [#allocation4], 1024
    $region41: #{tpu_custom_call.1} parent=1 // pred_fallthru
      _
    %1723 = vsyncpa [#allocation3], 1
    %1724 = vsyncpa [#allocation6], 1
    %1725 = vsyncpa [#allocation4], 1

</llo_original>
